<compile_context>
chip_gen: v5e
topology: v5e:2x2
jax: 0.10.0
libtpu: 0.0.40
codegen_flags: <defaults>
</compile_context>

<pallas_src>
import numpy as np
import jax
import jax.numpy as jnp
from jax import lax
from jax.experimental import pallas as pl
from jax.experimental.pallas import tpu as pltpu

SUB = 8      # sublane tile (channel padding)
LANES = 128  # lane tile


# ------------------------- packed parameter slab ---------------------------- #
def _layout(n_layers, k_size):
    """Column offsets inside the single [8, 128] parameter slab.
    Weight matrices are 8-column blocks [out_ch (sublanes), in_ch (cols)];
    biases are single columns."""
    k = k_size
    col_win = 0
    col_wd = lambda i, t: 8 * (1 + i * k + t)
    col_wp = lambda i: 8 * (1 + n_layers * k + i)
    col_wt1 = 8 * (1 + n_layers * k + n_layers)
    col_wt2 = col_wt1 + 8
    b0 = col_wt2 + 8
    col_bin = b0
    col_bd = lambda i: b0 + 1 + i
    col_bp = lambda i: b0 + 1 + n_layers + i
    col_bt1 = b0 + 1 + 2 * n_layers
    col_bt2 = col_bt1 + 1
    return dict(win=col_win, wd=col_wd, wp=col_wp, wt1=col_wt1, wt2=col_wt2,
                bin=col_bin, bd=col_bd, bp=col_bp, bt1=col_bt1, bt2=col_bt2,
                ncols=col_bt2 + 1)


def pack_params(params, n_layers, k_size):
    """Pack all weights/biases into one lane-dense (8, 128) f32 slab (done once)."""
    (Win, bin_, Wd, bd, Wp, bp, Wt1, bt1, Wt2, bt2) = [
        np.asarray(p, np.float32) for p in params]
    lay = _layout(n_layers, k_size)
    assert lay["ncols"] <= LANES, "parameter slab does not fit in 128 lanes"
    P = np.zeros((SUB, LANES), np.float32)

    def put_w(col, W):           # W: [out, in]
        P[:W.shape[0], col:col + W.shape[1]] = W

    def put_b(col, b):           # b: [out, 1]
        P[:b.shape[0], col] = b[:, 0]

    put_w(lay["win"], Win)
    for i in range(n_layers):
        for t in range(k_size):
            put_w(lay["wd"](i, t), Wd[i, t])
        put_w(lay["wp"](i), Wp[i])
        put_b(lay["bd"](i), bd[i])
        put_b(lay["bp"](i), bp[i])
    put_w(lay["wt1"], Wt1)
    put_w(lay["wt2"], Wt2)
    put_b(lay["bin"], bin_)
    put_b(lay["bt1"], bt1)
    put_b(lay["bt2"], bt2)
    return jnp.asarray(P)


# --------------------- slab / stripe geometry & packing --------------------- #
def _max_tap_shift(n_layers, k_size):
    return max(abs(t * (2 ** i) - ((2 ** i) * (k_size - 1)) // 2)
               for i in range(n_layers) for t in range(k_size))


def slab_geometry(n_layers, k_size, seq_len):
    """Stripe width (pow2 >= seq_len + max tap shift) and sequences per slab."""
    max_shift = _max_tap_shift(n_layers, k_size)
    assert seq_len + max_shift <= LANES, \
        "longer sequences need an L-tiled grid with halo exchange"
    stripe_w = int(pl.next_power_of_2(seq_len + max_shift))
    return stripe_w, LANES // stripe_w


def pack_sequences(x_seqs, c_in, seq_len, stripe_w, n_slabs):
    """[n_seq, c_in, L] -> packed (n_slabs*8, 128) slab stack, exact zeros
    elsewhere.  Host-side helper: a real pipeline keeps activations packed so
    the jitted forward stays a single pallas_call (no pad/slice dispatches)."""
    per_slab = LANES // stripe_w
    n_seq = x_seqs.shape[0]
    assert n_seq <= n_slabs * per_slab
    X = np.zeros((n_slabs * SUB, LANES), np.float32)
    for s in range(n_seq):
        sl, st = divmod(s, per_slab)
        X[sl * SUB: sl * SUB + c_in,
          st * stripe_w: st * stripe_w + seq_len] = np.asarray(x_seqs[s])
    return jnp.asarray(X)


def unpack_sequences(y_slabs, n_seq, c_out, seq_len, stripe_w):
    per_slab = LANES // stripe_w
    y = np.asarray(y_slabs)
    out = np.zeros((n_seq, c_out, seq_len), np.float32)
    for s in range(n_seq):
        sl, st = divmod(s, per_slab)
        out[s] = y[sl * SUB: sl * SUB + c_out,
                   st * stripe_w: st * stripe_w + seq_len]
    return out


# ----------------------------- Pallas kernel -------------------------------- #
def _tree_sum(terms):
    """Balanced pairwise reduction -> log-depth adder tree."""
    while len(terms) > 1:
        nxt = [terms[i] + terms[i + 1] for i in range(0, len(terms) - 1, 2)]
        if len(terms) % 2:
            nxt.append(terms[-1])
        terms = nxt
    return terms[0]


def make_tcn_kernel(n_layers, k_size, c_in, mid, seq_len, stripe_w):
    lay = _layout(n_layers, k_size)
    k = k_size
    N_PAR = 4   # independent FMA chains per contraction (then tree-summed)

    def kernel(x_ref, p_ref, o_ref, hs_ref):
        # Parameters: the whole slab is exactly one f32 vreg; load it ONCE and
        # take every weight column / bias as an in-register lane slice.
        P = p_ref[...]

        def wcol(c):                      # [SUB, 1]; lane-broadcast in use
            return P[:, c:c + 1]

        def contract(col0, rows):
            """sum_c P[:, col0+c] (outer) rows[c], as N_PAR independent mul/add
            chains + adder tree (contraction depth <= 8, so MXU stays idle and
            a single long chain would be the VALU critical path)."""
            n_in = len(rows)
            parts = []
            for p0 in range(min(N_PAR, n_in)):
                acc = None
                for c in range(p0, n_in, N_PAR):
                    t = wcol(col0 + c) * rows[c]        # [SUB,1]*[1,LANES]
                    acc = t if acc is None else acc + t
                parts.append(acc)
            return _tree_sum(parts)

        def stage_rows(val, n_rows):
            """Stage an activation slab once; return its rows as [1,LANES] loads
            (loaded with a replicated-sublane layout, so the load is the bcast)."""
            hs_ref[...] = val
            return [hs_ref[c:c + 1, :] for c in range(n_rows)]

        # Per-stripe lane masks (several independent sequences per 128-lane slab).
        col = lax.broadcasted_iota(jnp.int32, (SUB, LANES), 1)
        in_stripe = jnp.bitwise_and(col, stripe_w - 1)          # stripe_w is pow2
        lane_mask = (in_stripe < seq_len).astype(jnp.float32)
        mask0 = (in_stripe < seq_len - 1).astype(jnp.float32)   # layer-0 cat'd zero col

        # Input 1x1 conv: h = Win @ x + bin.  bin is masked because h feeds the
        # residual stream, whose guard lanes must stay exactly zero (that is
        # what makes the roll-based conv zero padding correct, per stripe).
        x_rows = [x_ref[c:c + 1, :] for c in range(c_in)]
        h = contract(lay["win"], x_rows) + wcol(lay["bin"]) * lane_mask

        for i in range(n_layers):                    # small static unroll
            dil = 2 ** i
            pad = (dil * (k - 1)) // 2               # == int(dil*(k-1)/2)
            rows = stage_rows(h, mid)                # stage h ONCE per layer
            # Dilated conv: the lane shift commutes with the channel contraction,
            # so each tap's partial sum is computed from the UNSHIFTED rows and
            # then rolled.  Guard lanes of h are exactly zero, so the circular
            # wrap supplies the conv's zero padding within every stripe.
            taps = []
            for t in range(k):
                pt = contract(lay["wd"](i, t), rows)
                s = t * dil - pad                    # tap reads h[:, j + s]
                if s % LANES:
                    # pltpu.roll == np.roll convention: out[j] = in[(j - shift) % n]
                    pt = pltpu.roll(pt, shift=(-s) % LANES, axis=1)
                taps.append(pt)
            acc = _tree_sum(taps) + wcol(lay["bd"](i))   # bias unmasked: re-masked below
            # Layer 0: conv output is L-1 long and column L-1 is the cat'd zero
            # column.  Every layer re-zeros the guard lanes of the stream.
            a = acc * (mask0 if i == 0 else lane_mask)
            g = jnp.tanh(a) * jax.nn.sigmoid(a)          # gated activation (EUP)
            g_rows = stage_rows(g, mid)
            skip = contract(lay["wp"](i), g_rows) + wcol(lay["bp"](i)) * lane_mask
            h = skip + h                                 # residual

        # top_to_out: ReLU -> 1x1 conv -> ReLU -> 1x1 conv -> Tanh.
        # Guard lanes carry junk from here on; consumers read only real lanes.
        r_rows = stage_rows(jnp.maximum(h, 0.0), mid)
        u = jnp.maximum(contract(lay["wt1"], r_rows) + wcol(lay["bt1"]), 0.0)
        u_rows = stage_rows(u, mid)
        o_ref[...] = jnp.tanh(contract(lay["wt2"], u_rows) + wcol(lay["bt2"]))
        # NOTE: on v7x it is worth A/B-ing one fused MXU jnp.dot over the
        # k*mid-deep tap contraction (MRB accumulates in place); the VPU path
        # here is the safe default for v5e/v6e.

    return kernel


# ------------------------------ wrapper ------------------------------------- #
def make_tcn_forward(n_layers, k_size, c_in, mid, c_out, seq_len, n_slabs=1):
    # Original forward() only works for even k_size and batch == 1 (see header).
    assert k_size % 2 == 0, "original forward() is only shape-consistent for even k_size"
    assert max(c_in, mid, c_out) <= SUB, "channel dims must fit one sublane tile"
    assert n_slabs >= 1
    stripe_w, _ = slab_geometry(n_layers, k_size, seq_len)

    kernel = make_tcn_kernel(n_layers, k_size, c_in, mid, seq_len, stripe_w)
    call = pl.pallas_call(
        kernel,
        out_shape=jax.ShapeDtypeStruct((n_slabs * SUB, LANES), jnp.float32),
        grid_spec=pltpu.PrefetchScalarGridSpec(
            num_scalar_prefetch=0,
            grid=(n_slabs,),
            in_specs=[
                pl.BlockSpec((SUB, LANES), lambda b: (b, 0)),   # activation slab b
                pl.BlockSpec((SUB, LANES), lambda b: (0, 0)),   # params stay resident
            ],
            out_specs=pl.BlockSpec((SUB, LANES), lambda b: (b, 0)),
            scratch_shapes=[pltpu.VMEM((SUB, LANES), jnp.float32)],
        ),
        compiler_params=pltpu.CompilerParams(
            dimension_semantics=("parallel",)),   # v7x: 2 TensorCores split the slabs
    )
    # The packed slab IS the calling convention: the jitted forward is a single
    # pallas_call with no pad/slice XLA dispatches around it.
    return jax.jit(call)


# ------------------------- pure-JAX reference (test oracle) ----------------- #
def tcn_reference(x, params, n_layers, k_size):
    (Win, bin_, Wd, bd, Wp, bp, Wt1, bt1, Wt2, bt2) = params
    hp = lax.Precision.HIGHEST
    h = jnp.einsum('oc,bcl->bol', Win, x, precision=hp) + bin_[None]
    for i in range(n_layers):
        dil = 2 ** i
        pad = int(dil * (k_size - 1) / 2)
        w_oik = jnp.transpose(Wd[i], (1, 2, 0))               # [k,O,I] -> [O,I,k]
        a = lax.conv_general_dilated(h, w_oik, window_strides=(1,),
                                     padding=[(pad, pad)], rhs_dilation=(dil,),
                                     dimension_numbers=('NCH', 'OIH', 'NCH'),
                                     precision=hp)
        a = a + bd[i][None]
        if i == 0:
            a = jnp.concatenate(
                [a, jnp.zeros((a.shape[0], a.shape[1], 1), a.dtype)], axis=2)
        g = jnp.tanh(a) * jax.nn.sigmoid(a)
        skip = jnp.einsum('oc,bcl->bol', Wp[i], g, precision=hp) + bp[i][None]
        h = skip + h
    r = jnp.maximum(h, 0.0)
    u = jnp.maximum(jnp.einsum('oc,bcl->bol', Wt1, r, precision=hp) + bt1[None], 0.0)
    return jnp.tanh(jnp.einsum('oc,bcl->bol', Wt2, u, precision=hp) + bt2[None])


# --------------------------------- main -------------------------------------- #
if __name__ == "__main__":
    # TCNNetwork(in_channels=4, mid_channels=8, out_channels=4, n_layers=3, k_size=2)
    Cin, mid, Cout, n_layers, k_size = 4, 8, 4, 3, 2
    L = 16
    n_seq = 8   # 8 independent batch-1 sequences: 4 per 128-lane slab x 2 slabs

    key = jax.random.PRNGKey(0)
    ks = jax.random.split(key, 12)
    sc = 0.3
    Win = sc * jax.random.normal(ks[0], (mid, Cin), jnp.float32)
    bin_ = sc * jax.random.normal(ks[1], (mid, 1), jnp.float32)
    Wd = sc * jax.random.normal(ks[2], (n_layers, k_size, mid, mid), jnp.float32)
    bd = sc * jax.random.normal(ks[3], (n_layers, mid, 1), jnp.float32)
    Wp = sc * jax.random.normal(ks[4], (n_layers, mid, mid), jnp.float32)
    bp = sc * jax.random.normal(ks[5], (n_layers, mid, 1), jnp.float32)
    Wt1 = sc * jax.random.normal(ks[6], (mid, mid), jnp.float32)
    bt1 = sc * jax.random.normal(ks[7], (mid, 1), jnp.float32)
    Wt2 = sc * jax.random.normal(ks[8], (Cout, mid), jnp.float32)
    bt2 = sc * jax.random.normal(ks[9], (Cout, 1), jnp.float32)
    params = (Win, bin_, Wd, bd, Wp, bp, Wt1, bt1, Wt2, bt2)
    # TODO(synk): skip_to_out (ReLU/ConvTranspose1d/ReLU/ConvTranspose1d/Tanh) is
    # built in __init__ but never used in forward(); not implemented.

    x = jax.random.normal(ks[10], (n_seq, Cin, L), jnp.float32)

    stripe_w, per_slab = slab_geometry(n_layers, k_size, L)
    n_slabs = (n_seq + per_slab - 1) // per_slab

    packed_params = pack_params(params, n_layers, k_size)          # once, at setup
    x_packed = pack_sequences(x, Cin, L, stripe_w, n_slabs)        # test-side packing
    tcn_forward = make_tcn_forward(n_layers, k_size, Cin, mid, Cout, L, n_slabs=n_slabs)

    y_slabs = jax.block_until_ready(tcn_forward(x_packed, packed_params))

    ref = jax.block_until_ready(tcn_reference(x, params, n_layers, k_size))
    out = unpack_sequences(y_slabs, n_seq, Cout, L, stripe_w)
    np.testing.assert_allclose(out, np.asarray(ref), rtol=1e-4, atol=1e-4)

    print("KERNEL_OK")
</pallas_src>

<mosaic_0001>
module attributes {stable_mosaic.version = 11 : i64} {
  func.func @kernel(%arg0: i32, %arg1: memref<8x128xf32, #tpu.memory_space<vmem>>, %arg2: memref<8x128xf32, #tpu.memory_space<vmem>>, %arg3: memref<8x128xf32, #tpu.memory_space<vmem>>, %arg4: memref<8x128xf32, #tpu.memory_space<vmem>>) attributes {dimension_semantics = [#tpu.dimension_semantics<parallel>], iteration_bounds = array<i64: 2>, scalar_prefetch = 0 : i64, scratch_operands = 1 : i64, tpu.core_type = #tpu.core_type<tc>, window_params = [{transform_indices = @transform_0, window_bounds = array<i64: 8, 128>}, {pipeline_mode = #tpu.pipeline_mode<synchronous>, transform_indices = @transform_1, window_bounds = array<i64: 8, 128>}, {transform_indices = @transform_2, window_bounds = array<i64: 8, 128>}]} {
    %c0 = arith.constant 0 : index
    %c0_0 = arith.constant 0 : index
    %0 = vector.load %arg2[%c0, %c0_0] : memref<8x128xf32, #tpu.memory_space<vmem>>, vector<8x128xf32>
    %1 = tpu.iota {dimensions = array<i32: 1>} : vector<8x128xi32>
    %c31_i32 = arith.constant 31 : i32
    %2 = vector.broadcast %c31_i32 : i32 to vector<8x128xi32>
    %3 = arith.andi %1, %2 : vector<8x128xi32>
    %c16_i32 = arith.constant 16 : i32
    %4 = vector.broadcast %c16_i32 : i32 to vector<8x128xi32>
    %5 = arith.cmpi slt, %3, %4 : vector<8x128xi32>
    %6 = arith.extui %5 : vector<8x128xi1> to vector<8x128xi32>
    %7 = arith.sitofp %6 : vector<8x128xi32> to vector<8x128xf32>
    %c15_i32 = arith.constant 15 : i32
    %8 = vector.broadcast %c15_i32 : i32 to vector<8x128xi32>
    %9 = arith.cmpi slt, %3, %8 : vector<8x128xi32>
    %10 = arith.extui %9 : vector<8x128xi1> to vector<8x128xi32>
    %11 = arith.sitofp %10 : vector<8x128xi32> to vector<8x128xf32>
    %c0_1 = arith.constant 0 : index
    %c0_2 = arith.constant 0 : index
    %12 = vector.load %arg1[%c0_1, %c0_2] : memref<8x128xf32, #tpu.memory_space<vmem>>, vector<1x128xf32>
    %c1 = arith.constant 1 : index
    %c0_3 = arith.constant 0 : index
    %13 = vector.load %arg1[%c1, %c0_3] : memref<8x128xf32, #tpu.memory_space<vmem>>, vector<1x128xf32>
    %c2 = arith.constant 2 : index
    %c0_4 = arith.constant 0 : index
    %14 = vector.load %arg1[%c2, %c0_4] : memref<8x128xf32, #tpu.memory_space<vmem>>, vector<1x128xf32>
    %c3 = arith.constant 3 : index
    %c0_5 = arith.constant 0 : index
    %15 = vector.load %arg1[%c3, %c0_5] : memref<8x128xf32, #tpu.memory_space<vmem>>, vector<1x128xf32>
    %16 = vector.extract_strided_slice %0 {offsets = [0, 0], sizes = [8, 1], strides = [1, 1]} : vector<8x128xf32> to vector<8x1xf32>
    %17 = vector.broadcast %16 : vector<8x1xf32> to vector<8x128xf32>
    %18 = vector.broadcast %12 : vector<1x128xf32> to vector<8x128xf32>
    %19 = arith.mulf %17, %18 : vector<8x128xf32>
    %20 = vector.extract_strided_slice %0 {offsets = [0, 1], sizes = [8, 1], strides = [1, 1]} : vector<8x128xf32> to vector<8x1xf32>
    %21 = vector.broadcast %20 : vector<8x1xf32> to vector<8x128xf32>
    %22 = vector.broadcast %13 : vector<1x128xf32> to vector<8x128xf32>
    %23 = arith.mulf %21, %22 : vector<8x128xf32>
    %24 = vector.extract_strided_slice %0 {offsets = [0, 2], sizes = [8, 1], strides = [1, 1]} : vector<8x128xf32> to vector<8x1xf32>
    %25 = vector.broadcast %24 : vector<8x1xf32> to vector<8x128xf32>
    %26 = vector.broadcast %14 : vector<1x128xf32> to vector<8x128xf32>
    %27 = arith.mulf %25, %26 : vector<8x128xf32>
    %28 = vector.extract_strided_slice %0 {offsets = [0, 3], sizes = [8, 1], strides = [1, 1]} : vector<8x128xf32> to vector<8x1xf32>
    %29 = vector.broadcast %28 : vector<8x1xf32> to vector<8x128xf32>
    %30 = vector.broadcast %15 : vector<1x128xf32> to vector<8x128xf32>
    %31 = arith.mulf %29, %30 : vector<8x128xf32>
    %32 = arith.addf %19, %23 : vector<8x128xf32>
    %33 = arith.addf %27, %31 : vector<8x128xf32>
    %34 = arith.addf %32, %33 : vector<8x128xf32>
    %35 = vector.extract_strided_slice %0 {offsets = [0, 96], sizes = [8, 1], strides = [1, 1]} : vector<8x128xf32> to vector<8x1xf32>
    %36 = vector.broadcast %35 : vector<8x1xf32> to vector<8x128xf32>
    %37 = arith.mulf %36, %7 : vector<8x128xf32>
    %38 = arith.addf %34, %37 : vector<8x128xf32>
    %c0_6 = arith.constant 0 : index
    %c0_7 = arith.constant 0 : index
    %39 = vector.load %arg4[%c0_6, %c0_7] : memref<8x128xf32, #tpu.memory_space<vmem>>, vector<8x128xf32>
    tpu.vector_store %arg4[%c0_6, %c0_7], %38 {strides = array<i32>} : memref<8x128xf32, #tpu.memory_space<vmem>>, vector<8x128xf32>,
    %c0_8 = arith.constant 0 : index
    %c0_9 = arith.constant 0 : index
    %40 = vector.load %arg4[%c0_8, %c0_9] : memref<8x128xf32, #tpu.memory_space<vmem>>, vector<1x128xf32>
    %c1_10 = arith.constant 1 : index
    %c0_11 = arith.constant 0 : index
    %41 = vector.load %arg4[%c1_10, %c0_11] : memref<8x128xf32, #tpu.memory_space<vmem>>, vector<1x128xf32>
    %c2_12 = arith.constant 2 : index
    %c0_13 = arith.constant 0 : index
    %42 = vector.load %arg4[%c2_12, %c0_13] : memref<8x128xf32, #tpu.memory_space<vmem>>, vector<1x128xf32>
    %c3_14 = arith.constant 3 : index
    %c0_15 = arith.constant 0 : index
    %43 = vector.load %arg4[%c3_14, %c0_15] : memref<8x128xf32, #tpu.memory_space<vmem>>, vector<1x128xf32>
    %c4 = arith.constant 4 : index
    %c0_16 = arith.constant 0 : index
    %44 = vector.load %arg4[%c4, %c0_16] : memref<8x128xf32, #tpu.memory_space<vmem>>, vector<1x128xf32>
    %c5 = arith.constant 5 : index
    %c0_17 = arith.constant 0 : index
    %45 = vector.load %arg4[%c5, %c0_17] : memref<8x128xf32, #tpu.memory_space<vmem>>, vector<1x128xf32>
    %c6 = arith.constant 6 : index
    %c0_18 = arith.constant 0 : index
    %46 = vector.load %arg4[%c6, %c0_18] : memref<8x128xf32, #tpu.memory_space<vmem>>, vector<1x128xf32>
    %c7 = arith.constant 7 : index
    %c0_19 = arith.constant 0 : index
    %47 = vector.load %arg4[%c7, %c0_19] : memref<8x128xf32, #tpu.memory_space<vmem>>, vector<1x128xf32>
    %48 = vector.extract_strided_slice %0 {offsets = [0, 8], sizes = [8, 1], strides = [1, 1]} : vector<8x128xf32> to vector<8x1xf32>
    %49 = vector.broadcast %48 : vector<8x1xf32> to vector<8x128xf32>
    %50 = vector.broadcast %40 : vector<1x128xf32> to vector<8x128xf32>
    %51 = arith.mulf %49, %50 : vector<8x128xf32>
    %52 = vector.extract_strided_slice %0 {offsets = [0, 12], sizes = [8, 1], strides = [1, 1]} : vector<8x128xf32> to vector<8x1xf32>
    %53 = vector.broadcast %52 : vector<8x1xf32> to vector<8x128xf32>
    %54 = vector.broadcast %44 : vector<1x128xf32> to vector<8x128xf32>
    %55 = arith.mulf %53, %54 : vector<8x128xf32>
    %56 = arith.addf %51, %55 : vector<8x128xf32>
    %57 = vector.extract_strided_slice %0 {offsets = [0, 9], sizes = [8, 1], strides = [1, 1]} : vector<8x128xf32> to vector<8x1xf32>
    %58 = vector.broadcast %57 : vector<8x1xf32> to vector<8x128xf32>
    %59 = vector.broadcast %41 : vector<1x128xf32> to vector<8x128xf32>
    %60 = arith.mulf %58, %59 : vector<8x128xf32>
    %61 = vector.extract_strided_slice %0 {offsets = [0, 13], sizes = [8, 1], strides = [1, 1]} : vector<8x128xf32> to vector<8x1xf32>
    %62 = vector.broadcast %61 : vector<8x1xf32> to vector<8x128xf32>
    %63 = vector.broadcast %45 : vector<1x128xf32> to vector<8x128xf32>
    %64 = arith.mulf %62, %63 : vector<8x128xf32>
    %65 = arith.addf %60, %64 : vector<8x128xf32>
    %66 = vector.extract_strided_slice %0 {offsets = [0, 10], sizes = [8, 1], strides = [1, 1]} : vector<8x128xf32> to vector<8x1xf32>
    %67 = vector.broadcast %66 : vector<8x1xf32> to vector<8x128xf32>
    %68 = vector.broadcast %42 : vector<1x128xf32> to vector<8x128xf32>
    %69 = arith.mulf %67, %68 : vector<8x128xf32>
    %70 = vector.extract_strided_slice %0 {offsets = [0, 14], sizes = [8, 1], strides = [1, 1]} : vector<8x128xf32> to vector<8x1xf32>
    %71 = vector.broadcast %70 : vector<8x1xf32> to vector<8x128xf32>
    %72 = vector.broadcast %46 : vector<1x128xf32> to vector<8x128xf32>
    %73 = arith.mulf %71, %72 : vector<8x128xf32>
    %74 = arith.addf %69, %73 : vector<8x128xf32>
    %75 = vector.extract_strided_slice %0 {offsets = [0, 11], sizes = [8, 1], strides = [1, 1]} : vector<8x128xf32> to vector<8x1xf32>
    %76 = vector.broadcast %75 : vector<8x1xf32> to vector<8x128xf32>
    %77 = vector.broadcast %43 : vector<1x128xf32> to vector<8x128xf32>
    %78 = arith.mulf %76, %77 : vector<8x128xf32>
    %79 = vector.extract_strided_slice %0 {offsets = [0, 15], sizes = [8, 1], strides = [1, 1]} : vector<8x128xf32> to vector<8x1xf32>
    %80 = vector.broadcast %79 : vector<8x1xf32> to vector<8x128xf32>
    %81 = vector.broadcast %47 : vector<1x128xf32> to vector<8x128xf32>
    %82 = arith.mulf %80, %81 : vector<8x128xf32>
    %83 = arith.addf %78, %82 : vector<8x128xf32>
    %84 = arith.addf %56, %65 : vector<8x128xf32>
    %85 = arith.addf %74, %83 : vector<8x128xf32>
    %86 = arith.addf %84, %85 : vector<8x128xf32>
    %87 = vector.extract_strided_slice %0 {offsets = [0, 16], sizes = [8, 1], strides = [1, 1]} : vector<8x128xf32> to vector<8x1xf32>
    %88 = vector.broadcast %87 : vector<8x1xf32> to vector<8x128xf32>
    %89 = vector.broadcast %40 : vector<1x128xf32> to vector<8x128xf32>
    %90 = arith.mulf %88, %89 : vector<8x128xf32>
    %91 = vector.extract_strided_slice %0 {offsets = [0, 20], sizes = [8, 1], strides = [1, 1]} : vector<8x128xf32> to vector<8x1xf32>
    %92 = vector.broadcast %91 : vector<8x1xf32> to vector<8x128xf32>
    %93 = vector.broadcast %44 : vector<1x128xf32> to vector<8x128xf32>
    %94 = arith.mulf %92, %93 : vector<8x128xf32>
    %95 = arith.addf %90, %94 : vector<8x128xf32>
    %96 = vector.extract_strided_slice %0 {offsets = [0, 17], sizes = [8, 1], strides = [1, 1]} : vector<8x128xf32> to vector<8x1xf32>
    %97 = vector.broadcast %96 : vector<8x1xf32> to vector<8x128xf32>
    %98 = vector.broadcast %41 : vector<1x128xf32> to vector<8x128xf32>
    %99 = arith.mulf %97, %98 : vector<8x128xf32>
    %100 = vector.extract_strided_slice %0 {offsets = [0, 21], sizes = [8, 1], strides = [1, 1]} : vector<8x128xf32> to vector<8x1xf32>
    %101 = vector.broadcast %100 : vector<8x1xf32> to vector<8x128xf32>
    %102 = vector.broadcast %45 : vector<1x128xf32> to vector<8x128xf32>
    %103 = arith.mulf %101, %102 : vector<8x128xf32>
    %104 = arith.addf %99, %103 : vector<8x128xf32>
    %105 = vector.extract_strided_slice %0 {offsets = [0, 18], sizes = [8, 1], strides = [1, 1]} : vector<8x128xf32> to vector<8x1xf32>
    %106 = vector.broadcast %105 : vector<8x1xf32> to vector<8x128xf32>
    %107 = vector.broadcast %42 : vector<1x128xf32> to vector<8x128xf32>
    %108 = arith.mulf %106, %107 : vector<8x128xf32>
    %109 = vector.extract_strided_slice %0 {offsets = [0, 22], sizes = [8, 1], strides = [1, 1]} : vector<8x128xf32> to vector<8x1xf32>
    %110 = vector.broadcast %109 : vector<8x1xf32> to vector<8x128xf32>
    %111 = vector.broadcast %46 : vector<1x128xf32> to vector<8x128xf32>
    %112 = arith.mulf %110, %111 : vector<8x128xf32>
    %113 = arith.addf %108, %112 : vector<8x128xf32>
    %114 = vector.extract_strided_slice %0 {offsets = [0, 19], sizes = [8, 1], strides = [1, 1]} : vector<8x128xf32> to vector<8x1xf32>
    %115 = vector.broadcast %114 : vector<8x1xf32> to vector<8x128xf32>
    %116 = vector.broadcast %43 : vector<1x128xf32> to vector<8x128xf32>
    %117 = arith.mulf %115, %116 : vector<8x128xf32>
    %118 = vector.extract_strided_slice %0 {offsets = [0, 23], sizes = [8, 1], strides = [1, 1]} : vector<8x128xf32> to vector<8x1xf32>
    %119 = vector.broadcast %118 : vector<8x1xf32> to vector<8x128xf32>
    %120 = vector.broadcast %47 : vector<1x128xf32> to vector<8x128xf32>
    %121 = arith.mulf %119, %120 : vector<8x128xf32>
    %122 = arith.addf %117, %121 : vector<8x128xf32>
    %123 = arith.addf %95, %104 : vector<8x128xf32>
    %124 = arith.addf %113, %122 : vector<8x128xf32>
    %125 = arith.addf %123, %124 : vector<8x128xf32>
    %c127_i32 = arith.constant 127 : i32
    %126 = tpu.dynamic_rotate %125 by %c127_i32 dim 1 : vector<8x128xf32>, i32 -> vector<8x128xf32>
    %127 = arith.addf %86, %126 : vector<8x128xf32>
    %128 = vector.extract_strided_slice %0 {offsets = [0, 97], sizes = [8, 1], strides = [1, 1]} : vector<8x128xf32> to vector<8x1xf32>
    %129 = vector.broadcast %128 : vector<8x1xf32> to vector<8x128xf32>
    %130 = arith.addf %127, %129 : vector<8x128xf32>
    %131 = arith.mulf %130, %11 : vector<8x128xf32>
    %132 = math.tanh %131 : vector<8x128xf32>
    %133 = arith.negf %131 : vector<8x128xf32>
    %134 = math.exp %133 : vector<8x128xf32>
    %cst = arith.constant 1.000000e+00 : f32
    %135 = vector.broadcast %cst : f32 to vector<8x128xf32>
    %136 = arith.addf %135, %134 : vector<8x128xf32>
    %137 = arith.divf %135, %136 : vector<8x128xf32>
    %138 = arith.mulf %132, %137 : vector<8x128xf32>
    %c0_20 = arith.constant 0 : index
    %c0_21 = arith.constant 0 : index
    %139 = vector.load %arg4[%c0_20, %c0_21] : memref<8x128xf32, #tpu.memory_space<vmem>>, vector<8x128xf32>
    tpu.vector_store %arg4[%c0_20, %c0_21], %138 {strides = array<i32>} : memref<8x128xf32, #tpu.memory_space<vmem>>, vector<8x128xf32>,
    %c0_22 = arith.constant 0 : index
    %c0_23 = arith.constant 0 : index
    %140 = vector.load %arg4[%c0_22, %c0_23] : memref<8x128xf32, #tpu.memory_space<vmem>>, vector<1x128xf32>
    %c1_24 = arith.constant 1 : index
    %c0_25 = arith.constant 0 : index
    %141 = vector.load %arg4[%c1_24, %c0_25] : memref<8x128xf32, #tpu.memory_space<vmem>>, vector<1x128xf32>
    %c2_26 = arith.constant 2 : index
    %c0_27 = arith.constant 0 : index
    %142 = vector.load %arg4[%c2_26, %c0_27] : memref<8x128xf32, #tpu.memory_space<vmem>>, vector<1x128xf32>
    %c3_28 = arith.constant 3 : index
    %c0_29 = arith.constant 0 : index
    %143 = vector.load %arg4[%c3_28, %c0_29] : memref<8x128xf32, #tpu.memory_space<vmem>>, vector<1x128xf32>
    %c4_30 = arith.constant 4 : index
    %c0_31 = arith.constant 0 : index
    %144 = vector.load %arg4[%c4_30, %c0_31] : memref<8x128xf32, #tpu.memory_space<vmem>>, vector<1x128xf32>
    %c5_32 = arith.constant 5 : index
    %c0_33 = arith.constant 0 : index
    %145 = vector.load %arg4[%c5_32, %c0_33] : memref<8x128xf32, #tpu.memory_space<vmem>>, vector<1x128xf32>
    %c6_34 = arith.constant 6 : index
    %c0_35 = arith.constant 0 : index
    %146 = vector.load %arg4[%c6_34, %c0_35] : memref<8x128xf32, #tpu.memory_space<vmem>>, vector<1x128xf32>
    %c7_36 = arith.constant 7 : index
    %c0_37 = arith.constant 0 : index
    %147 = vector.load %arg4[%c7_36, %c0_37] : memref<8x128xf32, #tpu.memory_space<vmem>>, vector<1x128xf32>
    %148 = vector.extract_strided_slice %0 {offsets = [0, 56], sizes = [8, 1], strides = [1, 1]} : vector<8x128xf32> to vector<8x1xf32>
    %149 = vector.broadcast %148 : vector<8x1xf32> to vector<8x128xf32>
    %150 = vector.broadcast %140 : vector<1x128xf32> to vector<8x128xf32>
    %151 = arith.mulf %149, %150 : vector<8x128xf32>
    %152 = vector.extract_strided_slice %0 {offsets = [0, 60], sizes = [8, 1], strides = [1, 1]} : vector<8x128xf32> to vector<8x1xf32>
    %153 = vector.broadcast %152 : vector<8x1xf32> to vector<8x128xf32>
    %154 = vector.broadcast %144 : vector<1x128xf32> to vector<8x128xf32>
    %155 = arith.mulf %153, %154 : vector<8x128xf32>
    %156 = arith.addf %151, %155 : vector<8x128xf32>
    %157 = vector.extract_strided_slice %0 {offsets = [0, 57], sizes = [8, 1], strides = [1, 1]} : vector<8x128xf32> to vector<8x1xf32>
    %158 = vector.broadcast %157 : vector<8x1xf32> to vector<8x128xf32>
    %159 = vector.broadcast %141 : vector<1x128xf32> to vector<8x128xf32>
    %160 = arith.mulf %158, %159 : vector<8x128xf32>
    %161 = vector.extract_strided_slice %0 {offsets = [0, 61], sizes = [8, 1], strides = [1, 1]} : vector<8x128xf32> to vector<8x1xf32>
    %162 = vector.broadcast %161 : vector<8x1xf32> to vector<8x128xf32>
    %163 = vector.broadcast %145 : vector<1x128xf32> to vector<8x128xf32>
    %164 = arith.mulf %162, %163 : vector<8x128xf32>
    %165 = arith.addf %160, %164 : vector<8x128xf32>
    %166 = vector.extract_strided_slice %0 {offsets = [0, 58], sizes = [8, 1], strides = [1, 1]} : vector<8x128xf32> to vector<8x1xf32>
    %167 = vector.broadcast %166 : vector<8x1xf32> to vector<8x128xf32>
    %168 = vector.broadcast %142 : vector<1x128xf32> to vector<8x128xf32>
    %169 = arith.mulf %167, %168 : vector<8x128xf32>
    %170 = vector.extract_strided_slice %0 {offsets = [0, 62], sizes = [8, 1], strides = [1, 1]} : vector<8x128xf32> to vector<8x1xf32>
    %171 = vector.broadcast %170 : vector<8x1xf32> to vector<8x128xf32>
    %172 = vector.broadcast %146 : vector<1x128xf32> to vector<8x128xf32>
    %173 = arith.mulf %171, %172 : vector<8x128xf32>
    %174 = arith.addf %169, %173 : vector<8x128xf32>
    %175 = vector.extract_strided_slice %0 {offsets = [0, 59], sizes = [8, 1], strides = [1, 1]} : vector<8x128xf32> to vector<8x1xf32>
    %176 = vector.broadcast %175 : vector<8x1xf32> to vector<8x128xf32>
    %177 = vector.broadcast %143 : vector<1x128xf32> to vector<8x128xf32>
    %178 = arith.mulf %176, %177 : vector<8x128xf32>
    %179 = vector.extract_strided_slice %0 {offsets = [0, 63], sizes = [8, 1], strides = [1, 1]} : vector<8x128xf32> to vector<8x1xf32>
    %180 = vector.broadcast %179 : vector<8x1xf32> to vector<8x128xf32>
    %181 = vector.broadcast %147 : vector<1x128xf32> to vector<8x128xf32>
    %182 = arith.mulf %180, %181 : vector<8x128xf32>
    %183 = arith.addf %178, %182 : vector<8x128xf32>
    %184 = arith.addf %156, %165 : vector<8x128xf32>
    %185 = arith.addf %174, %183 : vector<8x128xf32>
    %186 = arith.addf %184, %185 : vector<8x128xf32>
    %187 = vector.extract_strided_slice %0 {offsets = [0, 100], sizes = [8, 1], strides = [1, 1]} : vector<8x128xf32> to vector<8x1xf32>
    %188 = vector.broadcast %187 : vector<8x1xf32> to vector<8x128xf32>
    %189 = arith.mulf %188, %7 : vector<8x128xf32>
    %190 = arith.addf %186, %189 : vector<8x128xf32>
    %191 = arith.addf %190, %38 : vector<8x128xf32>
    %c0_38 = arith.constant 0 : index
    %c0_39 = arith.constant 0 : index
    %192 = vector.load %arg4[%c0_38, %c0_39] : memref<8x128xf32, #tpu.memory_space<vmem>>, vector<8x128xf32>
    tpu.vector_store %arg4[%c0_38, %c0_39], %191 {strides = array<i32>} : memref<8x128xf32, #tpu.memory_space<vmem>>, vector<8x128xf32>,
    %c0_40 = arith.constant 0 : index
    %c0_41 = arith.constant 0 : index
    %193 = vector.load %arg4[%c0_40, %c0_41] : memref<8x128xf32, #tpu.memory_space<vmem>>, vector<1x128xf32>
    %c1_42 = arith.constant 1 : index
    %c0_43 = arith.constant 0 : index
    %194 = vector.load %arg4[%c1_42, %c0_43] : memref<8x128xf32, #tpu.memory_space<vmem>>, vector<1x128xf32>
    %c2_44 = arith.constant 2 : index
    %c0_45 = arith.constant 0 : index
    %195 = vector.load %arg4[%c2_44, %c0_45] : memref<8x128xf32, #tpu.memory_space<vmem>>, vector<1x128xf32>
    %c3_46 = arith.constant 3 : index
    %c0_47 = arith.constant 0 : index
    %196 = vector.load %arg4[%c3_46, %c0_47] : memref<8x128xf32, #tpu.memory_space<vmem>>, vector<1x128xf32>
    %c4_48 = arith.constant 4 : index
    %c0_49 = arith.constant 0 : index
    %197 = vector.load %arg4[%c4_48, %c0_49] : memref<8x128xf32, #tpu.memory_space<vmem>>, vector<1x128xf32>
    %c5_50 = arith.constant 5 : index
    %c0_51 = arith.constant 0 : index
    %198 = vector.load %arg4[%c5_50, %c0_51] : memref<8x128xf32, #tpu.memory_space<vmem>>, vector<1x128xf32>
    %c6_52 = arith.constant 6 : index
    %c0_53 = arith.constant 0 : index
    %199 = vector.load %arg4[%c6_52, %c0_53] : memref<8x128xf32, #tpu.memory_space<vmem>>, vector<1x128xf32>
    %c7_54 = arith.constant 7 : index
    %c0_55 = arith.constant 0 : index
    %200 = vector.load %arg4[%c7_54, %c0_55] : memref<8x128xf32, #tpu.memory_space<vmem>>, vector<1x128xf32>
    %201 = vector.extract_strided_slice %0 {offsets = [0, 24], sizes = [8, 1], strides = [1, 1]} : vector<8x128xf32> to vector<8x1xf32>
    %202 = vector.broadcast %201 : vector<8x1xf32> to vector<8x128xf32>
    %203 = vector.broadcast %193 : vector<1x128xf32> to vector<8x128xf32>
    %204 = arith.mulf %202, %203 : vector<8x128xf32>
    %205 = vector.extract_strided_slice %0 {offsets = [0, 28], sizes = [8, 1], strides = [1, 1]} : vector<8x128xf32> to vector<8x1xf32>
    %206 = vector.broadcast %205 : vector<8x1xf32> to vector<8x128xf32>
    %207 = vector.broadcast %197 : vector<1x128xf32> to vector<8x128xf32>
    %208 = arith.mulf %206, %207 : vector<8x128xf32>
    %209 = arith.addf %204, %208 : vector<8x128xf32>
    %210 = vector.extract_strided_slice %0 {offsets = [0, 25], sizes = [8, 1], strides = [1, 1]} : vector<8x128xf32> to vector<8x1xf32>
    %211 = vector.broadcast %210 : vector<8x1xf32> to vector<8x128xf32>
    %212 = vector.broadcast %194 : vector<1x128xf32> to vector<8x128xf32>
    %213 = arith.mulf %211, %212 : vector<8x128xf32>
    %214 = vector.extract_strided_slice %0 {offsets = [0, 29], sizes = [8, 1], strides = [1, 1]} : vector<8x128xf32> to vector<8x1xf32>
    %215 = vector.broadcast %214 : vector<8x1xf32> to vector<8x128xf32>
    %216 = vector.broadcast %198 : vector<1x128xf32> to vector<8x128xf32>
    %217 = arith.mulf %215, %216 : vector<8x128xf32>
    %218 = arith.addf %213, %217 : vector<8x128xf32>
    %219 = vector.extract_strided_slice %0 {offsets = [0, 26], sizes = [8, 1], strides = [1, 1]} : vector<8x128xf32> to vector<8x1xf32>
    %220 = vector.broadcast %219 : vector<8x1xf32> to vector<8x128xf32>
    %221 = vector.broadcast %195 : vector<1x128xf32> to vector<8x128xf32>
    %222 = arith.mulf %220, %221 : vector<8x128xf32>
    %223 = vector.extract_strided_slice %0 {offsets = [0, 30], sizes = [8, 1], strides = [1, 1]} : vector<8x128xf32> to vector<8x1xf32>
    %224 = vector.broadcast %223 : vector<8x1xf32> to vector<8x128xf32>
    %225 = vector.broadcast %199 : vector<1x128xf32> to vector<8x128xf32>
    %226 = arith.mulf %224, %225 : vector<8x128xf32>
    %227 = arith.addf %222, %226 : vector<8x128xf32>
    %228 = vector.extract_strided_slice %0 {offsets = [0, 27], sizes = [8, 1], strides = [1, 1]} : vector<8x128xf32> to vector<8x1xf32>
    %229 = vector.broadcast %228 : vector<8x1xf32> to vector<8x128xf32>
    %230 = vector.broadcast %196 : vector<1x128xf32> to vector<8x128xf32>
    %231 = arith.mulf %229, %230 : vector<8x128xf32>
    %232 = vector.extract_strided_slice %0 {offsets = [0, 31], sizes = [8, 1], strides = [1, 1]} : vector<8x128xf32> to vector<8x1xf32>
    %233 = vector.broadcast %232 : vector<8x1xf32> to vector<8x128xf32>
    %234 = vector.broadcast %200 : vector<1x128xf32> to vector<8x128xf32>
    %235 = arith.mulf %233, %234 : vector<8x128xf32>
    %236 = arith.addf %231, %235 : vector<8x128xf32>
    %237 = arith.addf %209, %218 : vector<8x128xf32>
    %238 = arith.addf %227, %236 : vector<8x128xf32>
    %239 = arith.addf %237, %238 : vector<8x128xf32>
    %c1_i32 = arith.constant 1 : i32
    %240 = tpu.dynamic_rotate %239 by %c1_i32 dim 1 : vector<8x128xf32>, i32 -> vector<8x128xf32>
    %241 = vector.extract_strided_slice %0 {offsets = [0, 32], sizes = [8, 1], strides = [1, 1]} : vector<8x128xf32> to vector<8x1xf32>
    %242 = vector.broadcast %241 : vector<8x1xf32> to vector<8x128xf32>
    %243 = vector.broadcast %193 : vector<1x128xf32> to vector<8x128xf32>
    %244 = arith.mulf %242, %243 : vector<8x128xf32>
    %245 = vector.extract_strided_slice %0 {offsets = [0, 36], sizes = [8, 1], strides = [1, 1]} : vector<8x128xf32> to vector<8x1xf32>
    %246 = vector.broadcast %245 : vector<8x1xf32> to vector<8x128xf32>
    %247 = vector.broadcast %197 : vector<1x128xf32> to vector<8x128xf32>
    %248 = arith.mulf %246, %247 : vector<8x128xf32>
    %249 = arith.addf %244, %248 : vector<8x128xf32>
    %250 = vector.extract_strided_slice %0 {offsets = [0, 33], sizes = [8, 1], strides = [1, 1]} : vector<8x128xf32> to vector<8x1xf32>
    %251 = vector.broadcast %250 : vector<8x1xf32> to vector<8x128xf32>
    %252 = vector.broadcast %194 : vector<1x128xf32> to vector<8x128xf32>
    %253 = arith.mulf %251, %252 : vector<8x128xf32>
    %254 = vector.extract_strided_slice %0 {offsets = [0, 37], sizes = [8, 1], strides = [1, 1]} : vector<8x128xf32> to vector<8x1xf32>
    %255 = vector.broadcast %254 : vector<8x1xf32> to vector<8x128xf32>
    %256 = vector.broadcast %198 : vector<1x128xf32> to vector<8x128xf32>
    %257 = arith.mulf %255, %256 : vector<8x128xf32>
    %258 = arith.addf %253, %257 : vector<8x128xf32>
    %259 = vector.extract_strided_slice %0 {offsets = [0, 34], sizes = [8, 1], strides = [1, 1]} : vector<8x128xf32> to vector<8x1xf32>
    %260 = vector.broadcast %259 : vector<8x1xf32> to vector<8x128xf32>
    %261 = vector.broadcast %195 : vector<1x128xf32> to vector<8x128xf32>
    %262 = arith.mulf %260, %261 : vector<8x128xf32>
    %263 = vector.extract_strided_slice %0 {offsets = [0, 38], sizes = [8, 1], strides = [1, 1]} : vector<8x128xf32> to vector<8x1xf32>
    %264 = vector.broadcast %263 : vector<8x1xf32> to vector<8x128xf32>
    %265 = vector.broadcast %199 : vector<1x128xf32> to vector<8x128xf32>
    %266 = arith.mulf %264, %265 : vector<8x128xf32>
    %267 = arith.addf %262, %266 : vector<8x128xf32>
    %268 = vector.extract_strided_slice %0 {offsets = [0, 35], sizes = [8, 1], strides = [1, 1]} : vector<8x128xf32> to vector<8x1xf32>
    %269 = vector.broadcast %268 : vector<8x1xf32> to vector<8x128xf32>
    %270 = vector.broadcast %196 : vector<1x128xf32> to vector<8x128xf32>
    %271 = arith.mulf %269, %270 : vector<8x128xf32>
    %272 = vector.extract_strided_slice %0 {offsets = [0, 39], sizes = [8, 1], strides = [1, 1]} : vector<8x128xf32> to vector<8x1xf32>
    %273 = vector.broadcast %272 : vector<8x1xf32> to vector<8x128xf32>
    %274 = vector.broadcast %200 : vector<1x128xf32> to vector<8x128xf32>
    %275 = arith.mulf %273, %274 : vector<8x128xf32>
    %276 = arith.addf %271, %275 : vector<8x128xf32>
    %277 = arith.addf %249, %258 : vector<8x128xf32>
    %278 = arith.addf %267, %276 : vector<8x128xf32>
    %279 = arith.addf %277, %278 : vector<8x128xf32>
    %c127_i32_56 = arith.constant 127 : i32
    %280 = tpu.dynamic_rotate %279 by %c127_i32_56 dim 1 : vector<8x128xf32>, i32 -> vector<8x128xf32>
    %281 = arith.addf %240, %280 : vector<8x128xf32>
    %282 = vector.extract_strided_slice %0 {offsets = [0, 98], sizes = [8, 1], strides = [1, 1]} : vector<8x128xf32> to vector<8x1xf32>
    %283 = vector.broadcast %282 : vector<8x1xf32> to vector<8x128xf32>
    %284 = arith.addf %281, %283 : vector<8x128xf32>
    %285 = arith.mulf %284, %7 : vector<8x128xf32>
    %286 = math.tanh %285 : vector<8x128xf32>
    %287 = arith.negf %285 : vector<8x128xf32>
    %288 = math.exp %287 : vector<8x128xf32>
    %cst_57 = arith.constant 1.000000e+00 : f32
    %289 = vector.broadcast %cst_57 : f32 to vector<8x128xf32>
    %290 = arith.addf %289, %288 : vector<8x128xf32>
    %291 = arith.divf %289, %290 : vector<8x128xf32>
    %292 = arith.mulf %286, %291 : vector<8x128xf32>
    %c0_58 = arith.constant 0 : index
    %c0_59 = arith.constant 0 : index
    %293 = vector.load %arg4[%c0_58, %c0_59] : memref<8x128xf32, #tpu.memory_space<vmem>>, vector<8x128xf32>
    tpu.vector_store %arg4[%c0_58, %c0_59], %292 {strides = array<i32>} : memref<8x128xf32, #tpu.memory_space<vmem>>, vector<8x128xf32>,
    %c0_60 = arith.constant 0 : index
    %c0_61 = arith.constant 0 : index
    %294 = vector.load %arg4[%c0_60, %c0_61] : memref<8x128xf32, #tpu.memory_space<vmem>>, vector<1x128xf32>
    %c1_62 = arith.constant 1 : index
    %c0_63 = arith.constant 0 : index
    %295 = vector.load %arg4[%c1_62, %c0_63] : memref<8x128xf32, #tpu.memory_space<vmem>>, vector<1x128xf32>
    %c2_64 = arith.constant 2 : index
    %c0_65 = arith.constant 0 : index
    %296 = vector.load %arg4[%c2_64, %c0_65] : memref<8x128xf32, #tpu.memory_space<vmem>>, vector<1x128xf32>
    %c3_66 = arith.constant 3 : index
    %c0_67 = arith.constant 0 : index
    %297 = vector.load %arg4[%c3_66, %c0_67] : memref<8x128xf32, #tpu.memory_space<vmem>>, vector<1x128xf32>
    %c4_68 = arith.constant 4 : index
    %c0_69 = arith.constant 0 : index
    %298 = vector.load %arg4[%c4_68, %c0_69] : memref<8x128xf32, #tpu.memory_space<vmem>>, vector<1x128xf32>
    %c5_70 = arith.constant 5 : index
    %c0_71 = arith.constant 0 : index
    %299 = vector.load %arg4[%c5_70, %c0_71] : memref<8x128xf32, #tpu.memory_space<vmem>>, vector<1x128xf32>
    %c6_72 = arith.constant 6 : index
    %c0_73 = arith.constant 0 : index
    %300 = vector.load %arg4[%c6_72, %c0_73] : memref<8x128xf32, #tpu.memory_space<vmem>>, vector<1x128xf32>
    %c7_74 = arith.constant 7 : index
    %c0_75 = arith.constant 0 : index
    %301 = vector.load %arg4[%c7_74, %c0_75] : memref<8x128xf32, #tpu.memory_space<vmem>>, vector<1x128xf32>
    %302 = vector.extract_strided_slice %0 {offsets = [0, 64], sizes = [8, 1], strides = [1, 1]} : vector<8x128xf32> to vector<8x1xf32>
    %303 = vector.broadcast %302 : vector<8x1xf32> to vector<8x128xf32>
    %304 = vector.broadcast %294 : vector<1x128xf32> to vector<8x128xf32>
    %305 = arith.mulf %303, %304 : vector<8x128xf32>
    %306 = vector.extract_strided_slice %0 {offsets = [0, 68], sizes = [8, 1], strides = [1, 1]} : vector<8x128xf32> to vector<8x1xf32>
    %307 = vector.broadcast %306 : vector<8x1xf32> to vector<8x128xf32>
    %308 = vector.broadcast %298 : vector<1x128xf32> to vector<8x128xf32>
    %309 = arith.mulf %307, %308 : vector<8x128xf32>
    %310 = arith.addf %305, %309 : vector<8x128xf32>
    %311 = vector.extract_strided_slice %0 {offsets = [0, 65], sizes = [8, 1], strides = [1, 1]} : vector<8x128xf32> to vector<8x1xf32>
    %312 = vector.broadcast %311 : vector<8x1xf32> to vector<8x128xf32>
    %313 = vector.broadcast %295 : vector<1x128xf32> to vector<8x128xf32>
    %314 = arith.mulf %312, %313 : vector<8x128xf32>
    %315 = vector.extract_strided_slice %0 {offsets = [0, 69], sizes = [8, 1], strides = [1, 1]} : vector<8x128xf32> to vector<8x1xf32>
    %316 = vector.broadcast %315 : vector<8x1xf32> to vector<8x128xf32>
    %317 = vector.broadcast %299 : vector<1x128xf32> to vector<8x128xf32>
    %318 = arith.mulf %316, %317 : vector<8x128xf32>
    %319 = arith.addf %314, %318 : vector<8x128xf32>
    %320 = vector.extract_strided_slice %0 {offsets = [0, 66], sizes = [8, 1], strides = [1, 1]} : vector<8x128xf32> to vector<8x1xf32>
    %321 = vector.broadcast %320 : vector<8x1xf32> to vector<8x128xf32>
    %322 = vector.broadcast %296 : vector<1x128xf32> to vector<8x128xf32>
    %323 = arith.mulf %321, %322 : vector<8x128xf32>
    %324 = vector.extract_strided_slice %0 {offsets = [0, 70], sizes = [8, 1], strides = [1, 1]} : vector<8x128xf32> to vector<8x1xf32>
    %325 = vector.broadcast %324 : vector<8x1xf32> to vector<8x128xf32>
    %326 = vector.broadcast %300 : vector<1x128xf32> to vector<8x128xf32>
    %327 = arith.mulf %325, %326 : vector<8x128xf32>
    %328 = arith.addf %323, %327 : vector<8x128xf32>
    %329 = vector.extract_strided_slice %0 {offsets = [0, 67], sizes = [8, 1], strides = [1, 1]} : vector<8x128xf32> to vector<8x1xf32>
    %330 = vector.broadcast %329 : vector<8x1xf32> to vector<8x128xf32>
    %331 = vector.broadcast %297 : vector<1x128xf32> to vector<8x128xf32>
    %332 = arith.mulf %330, %331 : vector<8x128xf32>
    %333 = vector.extract_strided_slice %0 {offsets = [0, 71], sizes = [8, 1], strides = [1, 1]} : vector<8x128xf32> to vector<8x1xf32>
    %334 = vector.broadcast %333 : vector<8x1xf32> to vector<8x128xf32>
    %335 = vector.broadcast %301 : vector<1x128xf32> to vector<8x128xf32>
    %336 = arith.mulf %334, %335 : vector<8x128xf32>
    %337 = arith.addf %332, %336 : vector<8x128xf32>
    %338 = arith.addf %310, %319 : vector<8x128xf32>
    %339 = arith.addf %328, %337 : vector<8x128xf32>
    %340 = arith.addf %338, %339 : vector<8x128xf32>
    %341 = vector.extract_strided_slice %0 {offsets = [0, 101], sizes = [8, 1], strides = [1, 1]} : vector<8x128xf32> to vector<8x1xf32>
    %342 = vector.broadcast %341 : vector<8x1xf32> to vector<8x128xf32>
    %343 = arith.mulf %342, %7 : vector<8x128xf32>
    %344 = arith.addf %340, %343 : vector<8x128xf32>
    %345 = arith.addf %344, %191 : vector<8x128xf32>
    %c0_76 = arith.constant 0 : index
    %c0_77 = arith.constant 0 : index
    %346 = vector.load %arg4[%c0_76, %c0_77] : memref<8x128xf32, #tpu.memory_space<vmem>>, vector<8x128xf32>
    tpu.vector_store %arg4[%c0_76, %c0_77], %345 {strides = array<i32>} : memref<8x128xf32, #tpu.memory_space<vmem>>, vector<8x128xf32>,
    %c0_78 = arith.constant 0 : index
    %c0_79 = arith.constant 0 : index
    %347 = vector.load %arg4[%c0_78, %c0_79] : memref<8x128xf32, #tpu.memory_space<vmem>>, vector<1x128xf32>
    %c1_80 = arith.constant 1 : index
    %c0_81 = arith.constant 0 : index
    %348 = vector.load %arg4[%c1_80, %c0_81] : memref<8x128xf32, #tpu.memory_space<vmem>>, vector<1x128xf32>
    %c2_82 = arith.constant 2 : index
    %c0_83 = arith.constant 0 : index
    %349 = vector.load %arg4[%c2_82, %c0_83] : memref<8x128xf32, #tpu.memory_space<vmem>>, vector<1x128xf32>
    %c3_84 = arith.constant 3 : index
    %c0_85 = arith.constant 0 : index
    %350 = vector.load %arg4[%c3_84, %c0_85] : memref<8x128xf32, #tpu.memory_space<vmem>>, vector<1x128xf32>
    %c4_86 = arith.constant 4 : index
    %c0_87 = arith.constant 0 : index
    %351 = vector.load %arg4[%c4_86, %c0_87] : memref<8x128xf32, #tpu.memory_space<vmem>>, vector<1x128xf32>
    %c5_88 = arith.constant 5 : index
    %c0_89 = arith.constant 0 : index
    %352 = vector.load %arg4[%c5_88, %c0_89] : memref<8x128xf32, #tpu.memory_space<vmem>>, vector<1x128xf32>
    %c6_90 = arith.constant 6 : index
    %c0_91 = arith.constant 0 : index
    %353 = vector.load %arg4[%c6_90, %c0_91] : memref<8x128xf32, #tpu.memory_space<vmem>>, vector<1x128xf32>
    %c7_92 = arith.constant 7 : index
    %c0_93 = arith.constant 0 : index
    %354 = vector.load %arg4[%c7_92, %c0_93] : memref<8x128xf32, #tpu.memory_space<vmem>>, vector<1x128xf32>
    %355 = vector.extract_strided_slice %0 {offsets = [0, 40], sizes = [8, 1], strides = [1, 1]} : vector<8x128xf32> to vector<8x1xf32>
    %356 = vector.broadcast %355 : vector<8x1xf32> to vector<8x128xf32>
    %357 = vector.broadcast %347 : vector<1x128xf32> to vector<8x128xf32>
    %358 = arith.mulf %356, %357 : vector<8x128xf32>
    %359 = vector.extract_strided_slice %0 {offsets = [0, 44], sizes = [8, 1], strides = [1, 1]} : vector<8x128xf32> to vector<8x1xf32>
    %360 = vector.broadcast %359 : vector<8x1xf32> to vector<8x128xf32>
    %361 = vector.broadcast %351 : vector<1x128xf32> to vector<8x128xf32>
    %362 = arith.mulf %360, %361 : vector<8x128xf32>
    %363 = arith.addf %358, %362 : vector<8x128xf32>
    %364 = vector.extract_strided_slice %0 {offsets = [0, 41], sizes = [8, 1], strides = [1, 1]} : vector<8x128xf32> to vector<8x1xf32>
    %365 = vector.broadcast %364 : vector<8x1xf32> to vector<8x128xf32>
    %366 = vector.broadcast %348 : vector<1x128xf32> to vector<8x128xf32>
    %367 = arith.mulf %365, %366 : vector<8x128xf32>
    %368 = vector.extract_strided_slice %0 {offsets = [0, 45], sizes = [8, 1], strides = [1, 1]} : vector<8x128xf32> to vector<8x1xf32>
    %369 = vector.broadcast %368 : vector<8x1xf32> to vector<8x128xf32>
    %370 = vector.broadcast %352 : vector<1x128xf32> to vector<8x128xf32>
    %371 = arith.mulf %369, %370 : vector<8x128xf32>
    %372 = arith.addf %367, %371 : vector<8x128xf32>
    %373 = vector.extract_strided_slice %0 {offsets = [0, 42], sizes = [8, 1], strides = [1, 1]} : vector<8x128xf32> to vector<8x1xf32>
    %374 = vector.broadcast %373 : vector<8x1xf32> to vector<8x128xf32>
    %375 = vector.broadcast %349 : vector<1x128xf32> to vector<8x128xf32>
    %376 = arith.mulf %374, %375 : vector<8x128xf32>
    %377 = vector.extract_strided_slice %0 {offsets = [0, 46], sizes = [8, 1], strides = [1, 1]} : vector<8x128xf32> to vector<8x1xf32>
    %378 = vector.broadcast %377 : vector<8x1xf32> to vector<8x128xf32>
    %379 = vector.broadcast %353 : vector<1x128xf32> to vector<8x128xf32>
    %380 = arith.mulf %378, %379 : vector<8x128xf32>
    %381 = arith.addf %376, %380 : vector<8x128xf32>
    %382 = vector.extract_strided_slice %0 {offsets = [0, 43], sizes = [8, 1], strides = [1, 1]} : vector<8x128xf32> to vector<8x1xf32>
    %383 = vector.broadcast %382 : vector<8x1xf32> to vector<8x128xf32>
    %384 = vector.broadcast %350 : vector<1x128xf32> to vector<8x128xf32>
    %385 = arith.mulf %383, %384 : vector<8x128xf32>
    %386 = vector.extract_strided_slice %0 {offsets = [0, 47], sizes = [8, 1], strides = [1, 1]} : vector<8x128xf32> to vector<8x1xf32>
    %387 = vector.broadcast %386 : vector<8x1xf32> to vector<8x128xf32>
    %388 = vector.broadcast %354 : vector<1x128xf32> to vector<8x128xf32>
    %389 = arith.mulf %387, %388 : vector<8x128xf32>
    %390 = arith.addf %385, %389 : vector<8x128xf32>
    %391 = arith.addf %363, %372 : vector<8x128xf32>
    %392 = arith.addf %381, %390 : vector<8x128xf32>
    %393 = arith.addf %391, %392 : vector<8x128xf32>
    %c2_i32 = arith.constant 2 : i32
    %394 = tpu.dynamic_rotate %393 by %c2_i32 dim 1 : vector<8x128xf32>, i32 -> vector<8x128xf32>
    %395 = vector.extract_strided_slice %0 {offsets = [0, 48], sizes = [8, 1], strides = [1, 1]} : vector<8x128xf32> to vector<8x1xf32>
    %396 = vector.broadcast %395 : vector<8x1xf32> to vector<8x128xf32>
    %397 = vector.broadcast %347 : vector<1x128xf32> to vector<8x128xf32>
    %398 = arith.mulf %396, %397 : vector<8x128xf32>
    %399 = vector.extract_strided_slice %0 {offsets = [0, 52], sizes = [8, 1], strides = [1, 1]} : vector<8x128xf32> to vector<8x1xf32>
    %400 = vector.broadcast %399 : vector<8x1xf32> to vector<8x128xf32>
    %401 = vector.broadcast %351 : vector<1x128xf32> to vector<8x128xf32>
    %402 = arith.mulf %400, %401 : vector<8x128xf32>
    %403 = arith.addf %398, %402 : vector<8x128xf32>
    %404 = vector.extract_strided_slice %0 {offsets = [0, 49], sizes = [8, 1], strides = [1, 1]} : vector<8x128xf32> to vector<8x1xf32>
    %405 = vector.broadcast %404 : vector<8x1xf32> to vector<8x128xf32>
    %406 = vector.broadcast %348 : vector<1x128xf32> to vector<8x128xf32>
    %407 = arith.mulf %405, %406 : vector<8x128xf32>
    %408 = vector.extract_strided_slice %0 {offsets = [0, 53], sizes = [8, 1], strides = [1, 1]} : vector<8x128xf32> to vector<8x1xf32>
    %409 = vector.broadcast %408 : vector<8x1xf32> to vector<8x128xf32>
    %410 = vector.broadcast %352 : vector<1x128xf32> to vector<8x128xf32>
    %411 = arith.mulf %409, %410 : vector<8x128xf32>
    %412 = arith.addf %407, %411 : vector<8x128xf32>
    %413 = vector.extract_strided_slice %0 {offsets = [0, 50], sizes = [8, 1], strides = [1, 1]} : vector<8x128xf32> to vector<8x1xf32>
    %414 = vector.broadcast %413 : vector<8x1xf32> to vector<8x128xf32>
    %415 = vector.broadcast %349 : vector<1x128xf32> to vector<8x128xf32>
    %416 = arith.mulf %414, %415 : vector<8x128xf32>
    %417 = vector.extract_strided_slice %0 {offsets = [0, 54], sizes = [8, 1], strides = [1, 1]} : vector<8x128xf32> to vector<8x1xf32>
    %418 = vector.broadcast %417 : vector<8x1xf32> to vector<8x128xf32>
    %419 = vector.broadcast %353 : vector<1x128xf32> to vector<8x128xf32>
    %420 = arith.mulf %418, %419 : vector<8x128xf32>
    %421 = arith.addf %416, %420 : vector<8x128xf32>
    %422 = vector.extract_strided_slice %0 {offsets = [0, 51], sizes = [8, 1], strides = [1, 1]} : vector<8x128xf32> to vector<8x1xf32>
    %423 = vector.broadcast %422 : vector<8x1xf32> to vector<8x128xf32>
    %424 = vector.broadcast %350 : vector<1x128xf32> to vector<8x128xf32>
    %425 = arith.mulf %423, %424 : vector<8x128xf32>
    %426 = vector.extract_strided_slice %0 {offsets = [0, 55], sizes = [8, 1], strides = [1, 1]} : vector<8x128xf32> to vector<8x1xf32>
    %427 = vector.broadcast %426 : vector<8x1xf32> to vector<8x128xf32>
    %428 = vector.broadcast %354 : vector<1x128xf32> to vector<8x128xf32>
    %429 = arith.mulf %427, %428 : vector<8x128xf32>
    %430 = arith.addf %425, %429 : vector<8x128xf32>
    %431 = arith.addf %403, %412 : vector<8x128xf32>
    %432 = arith.addf %421, %430 : vector<8x128xf32>
    %433 = arith.addf %431, %432 : vector<8x128xf32>
    %c126_i32 = arith.constant 126 : i32
    %434 = tpu.dynamic_rotate %433 by %c126_i32 dim 1 : vector<8x128xf32>, i32 -> vector<8x128xf32>
    %435 = arith.addf %394, %434 : vector<8x128xf32>
    %436 = vector.extract_strided_slice %0 {offsets = [0, 99], sizes = [8, 1], strides = [1, 1]} : vector<8x128xf32> to vector<8x1xf32>
    %437 = vector.broadcast %436 : vector<8x1xf32> to vector<8x128xf32>
    %438 = arith.addf %435, %437 : vector<8x128xf32>
    %439 = arith.mulf %438, %7 : vector<8x128xf32>
    %440 = math.tanh %439 : vector<8x128xf32>
    %441 = arith.negf %439 : vector<8x128xf32>
    %442 = math.exp %441 : vector<8x128xf32>
    %cst_94 = arith.constant 1.000000e+00 : f32
    %443 = vector.broadcast %cst_94 : f32 to vector<8x128xf32>
    %444 = arith.addf %443, %442 : vector<8x128xf32>
    %445 = arith.divf %443, %444 : vector<8x128xf32>
    %446 = arith.mulf %440, %445 : vector<8x128xf32>
    %c0_95 = arith.constant 0 : index
    %c0_96 = arith.constant 0 : index
    %447 = vector.load %arg4[%c0_95, %c0_96] : memref<8x128xf32, #tpu.memory_space<vmem>>, vector<8x128xf32>
    tpu.vector_store %arg4[%c0_95, %c0_96], %446 {strides = array<i32>} : memref<8x128xf32, #tpu.memory_space<vmem>>, vector<8x128xf32>,
    %c0_97 = arith.constant 0 : index
    %c0_98 = arith.constant 0 : index
    %448 = vector.load %arg4[%c0_97, %c0_98] : memref<8x128xf32, #tpu.memory_space<vmem>>, vector<1x128xf32>
    %c1_99 = arith.constant 1 : index
    %c0_100 = arith.constant 0 : index
    %449 = vector.load %arg4[%c1_99, %c0_100] : memref<8x128xf32, #tpu.memory_space<vmem>>, vector<1x128xf32>
    %c2_101 = arith.constant 2 : index
    %c0_102 = arith.constant 0 : index
    %450 = vector.load %arg4[%c2_101, %c0_102] : memref<8x128xf32, #tpu.memory_space<vmem>>, vector<1x128xf32>
    %c3_103 = arith.constant 3 : index
    %c0_104 = arith.constant 0 : index
    %451 = vector.load %arg4[%c3_103, %c0_104] : memref<8x128xf32, #tpu.memory_space<vmem>>, vector<1x128xf32>
    %c4_105 = arith.constant 4 : index
    %c0_106 = arith.constant 0 : index
    %452 = vector.load %arg4[%c4_105, %c0_106] : memref<8x128xf32, #tpu.memory_space<vmem>>, vector<1x128xf32>
    %c5_107 = arith.constant 5 : index
    %c0_108 = arith.constant 0 : index
    %453 = vector.load %arg4[%c5_107, %c0_108] : memref<8x128xf32, #tpu.memory_space<vmem>>, vector<1x128xf32>
    %c6_109 = arith.constant 6 : index
    %c0_110 = arith.constant 0 : index
    %454 = vector.load %arg4[%c6_109, %c0_110] : memref<8x128xf32, #tpu.memory_space<vmem>>, vector<1x128xf32>
    %c7_111 = arith.constant 7 : index
    %c0_112 = arith.constant 0 : index
    %455 = vector.load %arg4[%c7_111, %c0_112] : memref<8x128xf32, #tpu.memory_space<vmem>>, vector<1x128xf32>
    %456 = vector.extract_strided_slice %0 {offsets = [0, 72], sizes = [8, 1], strides = [1, 1]} : vector<8x128xf32> to vector<8x1xf32>
    %457 = vector.broadcast %456 : vector<8x1xf32> to vector<8x128xf32>
    %458 = vector.broadcast %448 : vector<1x128xf32> to vector<8x128xf32>
    %459 = arith.mulf %457, %458 : vector<8x128xf32>
    %460 = vector.extract_strided_slice %0 {offsets = [0, 76], sizes = [8, 1], strides = [1, 1]} : vector<8x128xf32> to vector<8x1xf32>
    %461 = vector.broadcast %460 : vector<8x1xf32> to vector<8x128xf32>
    %462 = vector.broadcast %452 : vector<1x128xf32> to vector<8x128xf32>
    %463 = arith.mulf %461, %462 : vector<8x128xf32>
    %464 = arith.addf %459, %463 : vector<8x128xf32>
    %465 = vector.extract_strided_slice %0 {offsets = [0, 73], sizes = [8, 1], strides = [1, 1]} : vector<8x128xf32> to vector<8x1xf32>
    %466 = vector.broadcast %465 : vector<8x1xf32> to vector<8x128xf32>
    %467 = vector.broadcast %449 : vector<1x128xf32> to vector<8x128xf32>
    %468 = arith.mulf %466, %467 : vector<8x128xf32>
    %469 = vector.extract_strided_slice %0 {offsets = [0, 77], sizes = [8, 1], strides = [1, 1]} : vector<8x128xf32> to vector<8x1xf32>
    %470 = vector.broadcast %469 : vector<8x1xf32> to vector<8x128xf32>
    %471 = vector.broadcast %453 : vector<1x128xf32> to vector<8x128xf32>
    %472 = arith.mulf %470, %471 : vector<8x128xf32>
    %473 = arith.addf %468, %472 : vector<8x128xf32>
    %474 = vector.extract_strided_slice %0 {offsets = [0, 74], sizes = [8, 1], strides = [1, 1]} : vector<8x128xf32> to vector<8x1xf32>
    %475 = vector.broadcast %474 : vector<8x1xf32> to vector<8x128xf32>
    %476 = vector.broadcast %450 : vector<1x128xf32> to vector<8x128xf32>
    %477 = arith.mulf %475, %476 : vector<8x128xf32>
    %478 = vector.extract_strided_slice %0 {offsets = [0, 78], sizes = [8, 1], strides = [1, 1]} : vector<8x128xf32> to vector<8x1xf32>
    %479 = vector.broadcast %478 : vector<8x1xf32> to vector<8x128xf32>
    %480 = vector.broadcast %454 : vector<1x128xf32> to vector<8x128xf32>
    %481 = arith.mulf %479, %480 : vector<8x128xf32>
    %482 = arith.addf %477, %481 : vector<8x128xf32>
    %483 = vector.extract_strided_slice %0 {offsets = [0, 75], sizes = [8, 1], strides = [1, 1]} : vector<8x128xf32> to vector<8x1xf32>
    %484 = vector.broadcast %483 : vector<8x1xf32> to vector<8x128xf32>
    %485 = vector.broadcast %451 : vector<1x128xf32> to vector<8x128xf32>
    %486 = arith.mulf %484, %485 : vector<8x128xf32>
    %487 = vector.extract_strided_slice %0 {offsets = [0, 79], sizes = [8, 1], strides = [1, 1]} : vector<8x128xf32> to vector<8x1xf32>
    %488 = vector.broadcast %487 : vector<8x1xf32> to vector<8x128xf32>
    %489 = vector.broadcast %455 : vector<1x128xf32> to vector<8x128xf32>
    %490 = arith.mulf %488, %489 : vector<8x128xf32>
    %491 = arith.addf %486, %490 : vector<8x128xf32>
    %492 = arith.addf %464, %473 : vector<8x128xf32>
    %493 = arith.addf %482, %491 : vector<8x128xf32>
    %494 = arith.addf %492, %493 : vector<8x128xf32>
    %495 = vector.extract_strided_slice %0 {offsets = [0, 102], sizes = [8, 1], strides = [1, 1]} : vector<8x128xf32> to vector<8x1xf32>
    %496 = vector.broadcast %495 : vector<8x1xf32> to vector<8x128xf32>
    %497 = arith.mulf %496, %7 : vector<8x128xf32>
    %498 = arith.addf %494, %497 : vector<8x128xf32>
    %499 = arith.addf %498, %345 : vector<8x128xf32>
    %cst_113 = arith.constant 0.000000e+00 : f32
    %500 = vector.broadcast %cst_113 : f32 to vector<8x128xf32>
    %501 = arith.maximumf %499, %500 : vector<8x128xf32>
    %c0_114 = arith.constant 0 : index
    %c0_115 = arith.constant 0 : index
    %502 = vector.load %arg4[%c0_114, %c0_115] : memref<8x128xf32, #tpu.memory_space<vmem>>, vector<8x128xf32>
    tpu.vector_store %arg4[%c0_114, %c0_115], %501 {strides = array<i32>} : memref<8x128xf32, #tpu.memory_space<vmem>>, vector<8x128xf32>,
    %c0_116 = arith.constant 0 : index
    %c0_117 = arith.constant 0 : index
    %503 = vector.load %arg4[%c0_116, %c0_117] : memref<8x128xf32, #tpu.memory_space<vmem>>, vector<1x128xf32>
    %c1_118 = arith.constant 1 : index
    %c0_119 = arith.constant 0 : index
    %504 = vector.load %arg4[%c1_118, %c0_119] : memref<8x128xf32, #tpu.memory_space<vmem>>, vector<1x128xf32>
    %c2_120 = arith.constant 2 : index
    %c0_121 = arith.constant 0 : index
    %505 = vector.load %arg4[%c2_120, %c0_121] : memref<8x128xf32, #tpu.memory_space<vmem>>, vector<1x128xf32>
    %c3_122 = arith.constant 3 : index
    %c0_123 = arith.constant 0 : index
    %506 = vector.load %arg4[%c3_122, %c0_123] : memref<8x128xf32, #tpu.memory_space<vmem>>, vector<1x128xf32>
    %c4_124 = arith.constant 4 : index
    %c0_125 = arith.constant 0 : index
    %507 = vector.load %arg4[%c4_124, %c0_125] : memref<8x128xf32, #tpu.memory_space<vmem>>, vector<1x128xf32>
    %c5_126 = arith.constant 5 : index
    %c0_127 = arith.constant 0 : index
    %508 = vector.load %arg4[%c5_126, %c0_127] : memref<8x128xf32, #tpu.memory_space<vmem>>, vector<1x128xf32>
    %c6_128 = arith.constant 6 : index
    %c0_129 = arith.constant 0 : index
    %509 = vector.load %arg4[%c6_128, %c0_129] : memref<8x128xf32, #tpu.memory_space<vmem>>, vector<1x128xf32>
    %c7_130 = arith.constant 7 : index
    %c0_131 = arith.constant 0 : index
    %510 = vector.load %arg4[%c7_130, %c0_131] : memref<8x128xf32, #tpu.memory_space<vmem>>, vector<1x128xf32>
    %511 = vector.extract_strided_slice %0 {offsets = [0, 80], sizes = [8, 1], strides = [1, 1]} : vector<8x128xf32> to vector<8x1xf32>
    %512 = vector.broadcast %511 : vector<8x1xf32> to vector<8x128xf32>
    %513 = vector.broadcast %503 : vector<1x128xf32> to vector<8x128xf32>
    %514 = arith.mulf %512, %513 : vector<8x128xf32>
    %515 = vector.extract_strided_slice %0 {offsets = [0, 84], sizes = [8, 1], strides = [1, 1]} : vector<8x128xf32> to vector<8x1xf32>
    %516 = vector.broadcast %515 : vector<8x1xf32> to vector<8x128xf32>
    %517 = vector.broadcast %507 : vector<1x128xf32> to vector<8x128xf32>
    %518 = arith.mulf %516, %517 : vector<8x128xf32>
    %519 = arith.addf %514, %518 : vector<8x128xf32>
    %520 = vector.extract_strided_slice %0 {offsets = [0, 81], sizes = [8, 1], strides = [1, 1]} : vector<8x128xf32> to vector<8x1xf32>
    %521 = vector.broadcast %520 : vector<8x1xf32> to vector<8x128xf32>
    %522 = vector.broadcast %504 : vector<1x128xf32> to vector<8x128xf32>
    %523 = arith.mulf %521, %522 : vector<8x128xf32>
    %524 = vector.extract_strided_slice %0 {offsets = [0, 85], sizes = [8, 1], strides = [1, 1]} : vector<8x128xf32> to vector<8x1xf32>
    %525 = vector.broadcast %524 : vector<8x1xf32> to vector<8x128xf32>
    %526 = vector.broadcast %508 : vector<1x128xf32> to vector<8x128xf32>
    %527 = arith.mulf %525, %526 : vector<8x128xf32>
    %528 = arith.addf %523, %527 : vector<8x128xf32>
    %529 = vector.extract_strided_slice %0 {offsets = [0, 82], sizes = [8, 1], strides = [1, 1]} : vector<8x128xf32> to vector<8x1xf32>
    %530 = vector.broadcast %529 : vector<8x1xf32> to vector<8x128xf32>
    %531 = vector.broadcast %505 : vector<1x128xf32> to vector<8x128xf32>
    %532 = arith.mulf %530, %531 : vector<8x128xf32>
    %533 = vector.extract_strided_slice %0 {offsets = [0, 86], sizes = [8, 1], strides = [1, 1]} : vector<8x128xf32> to vector<8x1xf32>
    %534 = vector.broadcast %533 : vector<8x1xf32> to vector<8x128xf32>
    %535 = vector.broadcast %509 : vector<1x128xf32> to vector<8x128xf32>
    %536 = arith.mulf %534, %535 : vector<8x128xf32>
    %537 = arith.addf %532, %536 : vector<8x128xf32>
    %538 = vector.extract_strided_slice %0 {offsets = [0, 83], sizes = [8, 1], strides = [1, 1]} : vector<8x128xf32> to vector<8x1xf32>
    %539 = vector.broadcast %538 : vector<8x1xf32> to vector<8x128xf32>
    %540 = vector.broadcast %506 : vector<1x128xf32> to vector<8x128xf32>
    %541 = arith.mulf %539, %540 : vector<8x128xf32>
    %542 = vector.extract_strided_slice %0 {offsets = [0, 87], sizes = [8, 1], strides = [1, 1]} : vector<8x128xf32> to vector<8x1xf32>
    %543 = vector.broadcast %542 : vector<8x1xf32> to vector<8x128xf32>
    %544 = vector.broadcast %510 : vector<1x128xf32> to vector<8x128xf32>
    %545 = arith.mulf %543, %544 : vector<8x128xf32>
    %546 = arith.addf %541, %545 : vector<8x128xf32>
    %547 = arith.addf %519, %528 : vector<8x128xf32>
    %548 = arith.addf %537, %546 : vector<8x128xf32>
    %549 = arith.addf %547, %548 : vector<8x128xf32>
    %550 = vector.extract_strided_slice %0 {offsets = [0, 103], sizes = [8, 1], strides = [1, 1]} : vector<8x128xf32> to vector<8x1xf32>
    %551 = vector.broadcast %550 : vector<8x1xf32> to vector<8x128xf32>
    %552 = arith.addf %549, %551 : vector<8x128xf32>
    %cst_132 = arith.constant 0.000000e+00 : f32
    %553 = vector.broadcast %cst_132 : f32 to vector<8x128xf32>
    %554 = arith.maximumf %552, %553 : vector<8x128xf32>
    %c0_133 = arith.constant 0 : index
    %c0_134 = arith.constant 0 : index
    %555 = vector.load %arg4[%c0_133, %c0_134] : memref<8x128xf32, #tpu.memory_space<vmem>>, vector<8x128xf32>
    tpu.vector_store %arg4[%c0_133, %c0_134], %554 {strides = array<i32>} : memref<8x128xf32, #tpu.memory_space<vmem>>, vector<8x128xf32>,
    %c0_135 = arith.constant 0 : index
    %c0_136 = arith.constant 0 : index
    %556 = vector.load %arg4[%c0_135, %c0_136] : memref<8x128xf32, #tpu.memory_space<vmem>>, vector<1x128xf32>
    %c1_137 = arith.constant 1 : index
    %c0_138 = arith.constant 0 : index
    %557 = vector.load %arg4[%c1_137, %c0_138] : memref<8x128xf32, #tpu.memory_space<vmem>>, vector<1x128xf32>
    %c2_139 = arith.constant 2 : index
    %c0_140 = arith.constant 0 : index
    %558 = vector.load %arg4[%c2_139, %c0_140] : memref<8x128xf32, #tpu.memory_space<vmem>>, vector<1x128xf32>
    %c3_141 = arith.constant 3 : index
    %c0_142 = arith.constant 0 : index
    %559 = vector.load %arg4[%c3_141, %c0_142] : memref<8x128xf32, #tpu.memory_space<vmem>>, vector<1x128xf32>
    %c4_143 = arith.constant 4 : index
    %c0_144 = arith.constant 0 : index
    %560 = vector.load %arg4[%c4_143, %c0_144] : memref<8x128xf32, #tpu.memory_space<vmem>>, vector<1x128xf32>
    %c5_145 = arith.constant 5 : index
    %c0_146 = arith.constant 0 : index
    %561 = vector.load %arg4[%c5_145, %c0_146] : memref<8x128xf32, #tpu.memory_space<vmem>>, vector<1x128xf32>
    %c6_147 = arith.constant 6 : index
    %c0_148 = arith.constant 0 : index
    %562 = vector.load %arg4[%c6_147, %c0_148] : memref<8x128xf32, #tpu.memory_space<vmem>>, vector<1x128xf32>
    %c7_149 = arith.constant 7 : index
    %c0_150 = arith.constant 0 : index
    %563 = vector.load %arg4[%c7_149, %c0_150] : memref<8x128xf32, #tpu.memory_space<vmem>>, vector<1x128xf32>
    %564 = vector.extract_strided_slice %0 {offsets = [0, 88], sizes = [8, 1], strides = [1, 1]} : vector<8x128xf32> to vector<8x1xf32>
    %565 = vector.broadcast %564 : vector<8x1xf32> to vector<8x128xf32>
    %566 = vector.broadcast %556 : vector<1x128xf32> to vector<8x128xf32>
    %567 = arith.mulf %565, %566 : vector<8x128xf32>
    %568 = vector.extract_strided_slice %0 {offsets = [0, 92], sizes = [8, 1], strides = [1, 1]} : vector<8x128xf32> to vector<8x1xf32>
    %569 = vector.broadcast %568 : vector<8x1xf32> to vector<8x128xf32>
    %570 = vector.broadcast %560 : vector<1x128xf32> to vector<8x128xf32>
    %571 = arith.mulf %569, %570 : vector<8x128xf32>
    %572 = arith.addf %567, %571 : vector<8x128xf32>
    %573 = vector.extract_strided_slice %0 {offsets = [0, 89], sizes = [8, 1], strides = [1, 1]} : vector<8x128xf32> to vector<8x1xf32>
    %574 = vector.broadcast %573 : vector<8x1xf32> to vector<8x128xf32>
    %575 = vector.broadcast %557 : vector<1x128xf32> to vector<8x128xf32>
    %576 = arith.mulf %574, %575 : vector<8x128xf32>
    %577 = vector.extract_strided_slice %0 {offsets = [0, 93], sizes = [8, 1], strides = [1, 1]} : vector<8x128xf32> to vector<8x1xf32>
    %578 = vector.broadcast %577 : vector<8x1xf32> to vector<8x128xf32>
    %579 = vector.broadcast %561 : vector<1x128xf32> to vector<8x128xf32>
    %580 = arith.mulf %578, %579 : vector<8x128xf32>
    %581 = arith.addf %576, %580 : vector<8x128xf32>
    %582 = vector.extract_strided_slice %0 {offsets = [0, 90], sizes = [8, 1], strides = [1, 1]} : vector<8x128xf32> to vector<8x1xf32>
    %583 = vector.broadcast %582 : vector<8x1xf32> to vector<8x128xf32>
    %584 = vector.broadcast %558 : vector<1x128xf32> to vector<8x128xf32>
    %585 = arith.mulf %583, %584 : vector<8x128xf32>
    %586 = vector.extract_strided_slice %0 {offsets = [0, 94], sizes = [8, 1], strides = [1, 1]} : vector<8x128xf32> to vector<8x1xf32>
    %587 = vector.broadcast %586 : vector<8x1xf32> to vector<8x128xf32>
    %588 = vector.broadcast %562 : vector<1x128xf32> to vector<8x128xf32>
    %589 = arith.mulf %587, %588 : vector<8x128xf32>
    %590 = arith.addf %585, %589 : vector<8x128xf32>
    %591 = vector.extract_strided_slice %0 {offsets = [0, 91], sizes = [8, 1], strides = [1, 1]} : vector<8x128xf32> to vector<8x1xf32>
    %592 = vector.broadcast %591 : vector<8x1xf32> to vector<8x128xf32>
    %593 = vector.broadcast %559 : vector<1x128xf32> to vector<8x128xf32>
    %594 = arith.mulf %592, %593 : vector<8x128xf32>
    %595 = vector.extract_strided_slice %0 {offsets = [0, 95], sizes = [8, 1], strides = [1, 1]} : vector<8x128xf32> to vector<8x1xf32>
    %596 = vector.broadcast %595 : vector<8x1xf32> to vector<8x128xf32>
    %597 = vector.broadcast %563 : vector<1x128xf32> to vector<8x128xf32>
    %598 = arith.mulf %596, %597 : vector<8x128xf32>
    %599 = arith.addf %594, %598 : vector<8x128xf32>
    %600 = arith.addf %572, %581 : vector<8x128xf32>
    %601 = arith.addf %590, %599 : vector<8x128xf32>
    %602 = arith.addf %600, %601 : vector<8x128xf32>
    %603 = vector.extract_strided_slice %0 {offsets = [0, 104], sizes = [8, 1], strides = [1, 1]} : vector<8x128xf32> to vector<8x1xf32>
    %604 = vector.broadcast %603 : vector<8x1xf32> to vector<8x128xf32>
    %605 = arith.addf %602, %604 : vector<8x128xf32>
    %606 = math.tanh %605 : vector<8x128xf32>
    %c0_151 = arith.constant 0 : index
    %c0_152 = arith.constant 0 : index
    %607 = vector.load %arg3[%c0_151, %c0_152] : memref<8x128xf32, #tpu.memory_space<vmem>>, vector<8x128xf32>
    tpu.vector_store %arg3[%c0_151, %c0_152], %606 {strides = array<i32>} : memref<8x128xf32, #tpu.memory_space<vmem>>, vector<8x128xf32>,
    return
  }
  func.func @transform_0(%arg0: i32) -> (i32, i32) {
    %c0_i32 = arith.constant 0 : i32
    %c0_i32_0 = arith.constant 0 : i32
    return %arg0, %c0_i32 : i32, i32
  }
  func.func @transform_1(%arg0: i32) -> (i32, i32) {
    %c0_i32 = arith.constant 0 : i32
    %c0_i32_0 = arith.constant 0 : i32
    %c0_i32_1 = arith.constant 0 : i32
    return %c0_i32, %c0_i32_0 : i32, i32
  }
  func.func @transform_2(%arg0: i32) -> (i32, i32) {
    %c0_i32 = arith.constant 0 : i32
    %c0_i32_0 = arith.constant 0 : i32
    return %arg0, %c0_i32 : i32, i32
  }
}

</mosaic_0001>

<llo_original>
// kernel: tpu_custom_call.1
$region0: #{tpu_custom_call.1}
  #allocation0 [shape = 'u32[]', space=smem, size = 0x4, offset = 0x4, fixed_abs, tag = 'smem constant byte address 0x4 - core index']
  #allocation1 [shape = 'u32[72,128]{1,0:T(1,128)}', space=vmem, size = 0x9000, scoped, tag = 'internal scratch']
  #allocation2 [shape = 'f32[8,128]{1,0:T(8,128)}', space=vmem, size = 0x1000, scoped, tag = 'scratch operand']
  %s0 = inlined_call_operand.hbm [shape: f32[16,128], index: 0, kind: input, shape index: {}]
  %s1 = inlined_call_operand.hbm [shape: f32[8,128], index: 1, kind: input, shape index: {}]
  %s2 = inlined_call_operand.hbm [shape: f32[16,128], index: 2, kind: output, shape index: {}]
  %s3 = sld [smem:[#allocation0]]
  $region49: #{tpu_custom_call.1} parent=0
    _
  %s5 = ssub.s32 1, %s3
  %s6 = scalar_select 0, %s5, %s3
  $region1: #{tpu_custom_call.1} parent=0
    #allocation3 [shape = 'u8[8192]{0}', space=vmem, size = 0x2000, scoped, tag = 'input window, operand 0']
    #allocation4 [shape = 's32[2]{0}', space=sflag, size = 0x8, scoped, tag = 'scoped memory for tpu_custom_call.1']
    #allocation5 [shape = 's32[2]{0}', space=sflag, size = 0x8, scoped, tag = 'scoped memory for tpu_custom_call.1']
    #allocation6 [shape = 'u8[4096]{0}', space=vmem, size = 0x1000, scoped, tag = 'input window, operand 1, single buffered']
    #allocation7 [shape = 's32[1]{0}', space=sflag, size = 0x4, scoped, tag = 'scoped memory for tpu_custom_call.1']
    #allocation8 [shape = 'u8[8192]{0}', space=vmem, size = 0x2000, scoped, tag = 'output window, operand 0']
    %7 = vsyncpa [#allocation4], 0
    %s8 = scalar_lea.sflag [#allocation4], 1
    %9 = vsyncpa %s8, 0
    %10 = vsyncpa [#allocation7], 0
    %11 = vsyncpa [#allocation5], 0
    %s12 = scalar_lea.sflag [#allocation5], 1
    %13 = vsyncpa %s12, 0
    loop: start=0, step=1, limit=4
    $region2: #{tpu_custom_call.1} parent=1 // loop_pre_header
      _
    $region3: #{tpu_custom_call.1} parent=1 // loop_header
      %s15 = sphi 0, %s19
      %p16 = scmp.ge.s32.totalorder %s15, 4
      %s25 = sphi 0, %s27
      %s28 = sphi 0, %s25
      %s29 = sphi 0, %s28
      %s45 = sphi 0, %s29
      %s49 = sphi 0, %s49
      %s51 = sphi 0, %s49
      %s52 = sphi 0, %s51
      %s66 = sphi 0, %s52
      %s72 = sphi 0, %s74
      %s75 = sphi 0, %s72
      %s76 = sphi 0, %s75
      %s92 = sphi 0, %s76
    $region4: #{tpu_custom_call.1} parent=1 // loop_header_branch
      %18 = sbr.rel (%p16) target = $region8
    $region5: #{tpu_custom_call.1} parent=1 // loop_body
      %s20 = ssub.s32 %s15, 1
      %s21 = ssub.s32 %s15, 2
      %s22 = sadd.s32 %s15, 1
      %s23 = ssub.s32 %s15, %s22
      %p24 = scmp.eq.s32.totalorder %s23, 0
      %s26 = sadd.s32 %s25, 1
      %s27 = scalar_select %p24, %s25, %s26
      %p30 = pneg %p24
      %p31 = scmp.eq.s32.totalorder %s15, 1
      %p32 = por %p30, %p31
      %p33 = scmp.ne.s32.totalorder %s25, %s28
      %p34 = scmp.eq.s32.totalorder %s15, 0
      %p35 = por %p33, %p34
      %p36 = scmp.ne.s32.totalorder %s25, %s28
      %p37 = scmp.eq.s32.totalorder %s20, 1
      %p38 = por %p36, %p37
      %p39 = scmp.ne.s32.totalorder %s28, %s29
      %p40 = scmp.eq.s32.totalorder %s20, 0
      %p41 = por %p39, %p40
      %p42 = scmp.ne.s32.totalorder %s28, %s29
      %p43 = scmp.eq.s32.totalorder %s21, 1
      %p44 = por %p42, %p43
      %p46 = scmp.ne.s32.totalorder %s29, %s45
      %p47 = scmp.eq.s32.totalorder %s21, 0
      %p48 = por %p46, %p47
      %s50 = sadd.s32 %s49, 1
      %p53 = scmp.eq.s32.totalorder %s15, 1
      %p54 = scmp.ne.s32.totalorder %s49, %s51
      %p55 = scmp.eq.s32.totalorder %s15, 0
      %p56 = por %p54, %p55
      %p57 = scmp.ne.s32.totalorder %s49, %s51
      %p58 = scmp.eq.s32.totalorder %s20, 1
      %p59 = por %p57, %p58
      %p60 = scmp.ne.s32.totalorder %s51, %s52
      %p61 = scmp.eq.s32.totalorder %s20, 0
      %p62 = por %p60, %p61
      %p63 = scmp.ne.s32.totalorder %s51, %s52
      %p64 = scmp.eq.s32.totalorder %s21, 1
      %p65 = por %p63, %p64
      %p67 = scmp.ne.s32.totalorder %s52, %s66
      %p68 = scmp.eq.s32.totalorder %s21, 0
      %p69 = por %p67, %p68
      %s70 = ssub.s32 %s15, %s22
      %p71 = scmp.eq.s32.totalorder %s70, 0
      %s73 = sadd.s32 %s72, 1
      %s74 = scalar_select %p71, %s72, %s73
      %p77 = pneg %p71
      %p78 = scmp.eq.s32.totalorder %s15, 1
      %p79 = por %p77, %p78
      %p80 = scmp.ne.s32.totalorder %s72, %s75
      %p81 = scmp.eq.s32.totalorder %s15, 0
      %p82 = por %p80, %p81
      %p83 = scmp.ne.s32.totalorder %s72, %s75
      %p84 = scmp.eq.s32.totalorder %s20, 1
      %p85 = por %p83, %p84
      %p86 = scmp.ne.s32.totalorder %s75, %s76
      %p87 = scmp.eq.s32.totalorder %s20, 0
      %p88 = por %p86, %p87
      %p89 = scmp.ne.s32.totalorder %s75, %s76
      %p90 = scmp.eq.s32.totalorder %s21, 1
      %p91 = por %p89, %p90
      %p93 = scmp.ne.s32.totalorder %s76, %s92
      %p94 = scmp.eq.s32.totalorder %s21, 0
      %p95 = por %p93, %p94
      %p96 = scmp.le.s32.totalorder 1, %s15
      %p97 = scmp.lt.s32.totalorder %s15, 3
      %p98 = pnand %p96, %p97
      %p99 = pneg %p98
      // Predicated region
      $region9: #{tpu_custom_call.1} parent=5 // pred_check
        _
      $region10: #{tpu_custom_call.1} parent=5 // pred_check_branch
        %101 = sbr.rel (%p98) target = $region12
      $region11: #{tpu_custom_call.1} parent=5 // pred_region
        %s102 = ssub.s32 %s15, 1
        // Predicated region
        $region13: #{tpu_custom_call.1} parent=11 // pred_check
          %p103 = pneg %p62
        $region14: #{tpu_custom_call.1} parent=11 // pred_check_branch
          %105 = sbr.rel (%p103) target = $region16
        $region15: #{tpu_custom_call.1} parent=11 // pred_region
          %107 = vsyncadd [#allocation7], 0
          %s109 = sshll.u32 %s1, 4
          %s110 = int_to_ptr.hbm [resolvable:$true] %s109
          %s111 = sshll.u32 [#allocation6], 4
          %s112 = int_to_ptr.vmem [resolvable:$true] %s111
          %114 = dma.hbm_to_vmem [thread:$0]  %s110, 128, %s112, [#allocation7]
        $region16: #{tpu_custom_call.1} parent=11 // pred_fallthru
          _
      $region12: #{tpu_custom_call.1} parent=5 // pred_fallthru
        _
      %p115 = scmp.lt.s32.totalorder %s15, 2
      // Predicated region
      $region17: #{tpu_custom_call.1} parent=5 // pred_check
        %p116 = pneg %p115
      $region18: #{tpu_custom_call.1} parent=5 // pred_check_branch
        %118 = sbr.rel (%p116) target = $region20
      $region19: #{tpu_custom_call.1} parent=5 // pred_region
        // Predicated region
        $region21: #{tpu_custom_call.1} parent=19 // pred_check
          %p119 = pneg %p35
        $region22: #{tpu_custom_call.1} parent=19 // pred_check_branch
          %121 = sbr.rel (%p119) target = $region24
        $region23: #{tpu_custom_call.1} parent=19 // pred_region
          %s122 = sand.u32 %s25, 1
          %s123 = scalar_lea.sflag [#allocation4], %s122
          %s124 = sand.u32 %s25, 1
          %s125 = smul.addr %s124, 8
          %s126 = scalar_lea.vmem [#allocation3], %s125
          %128 = vsyncadd %s123, 0
          %s129 = smul.addr %s15, 8
          %s130 = scalar_lea.hbm %s0, %s129
          %s132 = sshll.u32 %s130, 4
          %s133 = int_to_ptr.hbm [resolvable:$true] %s132
          %s134 = sshll.u32 %s126, 4
          %s135 = int_to_ptr.vmem [resolvable:$true] %s134
          %137 = dma.hbm_to_vmem [thread:$0]  %s133, 128, %s135, %s123
        $region24: #{tpu_custom_call.1} parent=19 // pred_fallthru
          _
      $region20: #{tpu_custom_call.1} parent=5 // pred_fallthru
        _
      %p138 = scmp.le.s32.totalorder 1, %s15
      %p139 = scmp.lt.s32.totalorder %s15, 3
      %p140 = pnand %p138, %p139
      %p141 = pneg %p140
      // Predicated region
      $region25: #{tpu_custom_call.1} parent=5 // pred_check
        _
      $region26: #{tpu_custom_call.1} parent=5 // pred_check_branch
        %143 = sbr.rel (%p140) target = $region28
      $region27: #{tpu_custom_call.1} parent=5 // pred_region
        %s144 = ssub.s32 %s15, 1
        %s145 = sand.u32 %s28, 1
        %s146 = scalar_lea.sflag [#allocation4], %s145
        %s147 = sand.u32 %s28, 1
        %s148 = smul.addr %s147, 8
        %s149 = scalar_lea.vmem [#allocation3], %s148
        // Predicated region
        $region29: #{tpu_custom_call.1} parent=27 // pred_check
          %p150 = pneg %p41
        $region30: #{tpu_custom_call.1} parent=27 // pred_check_branch
          %152 = sbr.rel (%p150) target = $region32
        $region31: #{tpu_custom_call.1} parent=27 // pred_region
          %154 = dma.done %s146, 128
        $region32: #{tpu_custom_call.1} parent=27 // pred_fallthru
          _
        // Predicated region
        $region33: #{tpu_custom_call.1} parent=27 // pred_check
          %p155 = pneg %p62
        $region34: #{tpu_custom_call.1} parent=27 // pred_check_branch
          %157 = sbr.rel (%p155) target = $region36
        $region35: #{tpu_custom_call.1} parent=27 // pred_region
          %159 = dma.done [#allocation7], 128
        $region36: #{tpu_custom_call.1} parent=27 // pred_fallthru
          _
        %s160 = sand.u32 %s28, 1
        %s161 = scalar_lea.sflag [#allocation4], %s160
        %s162 = sand.u32 %s28, 1
        %s163 = smul.addr %s162, 8
        %s164 = scalar_lea.vmem [#allocation3], %s163
        %p165 = pneg %p41
        %p166 = pneg %p38
        %p167 = pneg %p62
        %p168 = pneg %p59
        %p169 = pneg %p88
        %p170 = pneg %p85
        %s171 = sand.u32 %s75, 1
        %s172 = scalar_lea.sflag [#allocation5], %s171
        %s173 = sand.u32 %s75, 1
        %s174 = smul.addr %s173, 8
        %s175 = scalar_lea.vmem [#allocation8], %s174
        %v176 = vld [vmem:[#allocation6] sm:$0xff]
        %v177 = vlaneseq
        %v178 = vand.u32 %v177, 127
        %v179 = vand.u32 %v178, 31
        %vm180 = vcmp.lt.s32.totalorder %v179, 16
        %v181 = vsel %vm180, 1, 0
        %v182 = vcvt.s32.f32 %v181
        %vm183 = vcmp.lt.s32.totalorder %v179, 15
        %v184 = vsel %vm183, 1, 0
        %v185 = vcvt.s32.f32 %v184
        %v186 = vld [vmem:[%s149] sm:$0x1]
        %v187 = vld [vmem:[%s149 + $0x1] sm:$0x1]
        %v188 = vld [vmem:[%s149 + $0x2] sm:$0x1]
        %v189 = vld [vmem:[%s149 + $0x3] sm:$0x1]
        %191 = vset.pattern.permute.xlu0 0
        %192 = vperm.xlu0 %191, %v176
        %v193 = vpop.permute.xlu0 %192
        %v195 = vperm.slane %v186, 0
        %v196 = vmul.f32 %v193, %v195
        %197 = vset.pattern.permute.xlu0 1
        %198 = vperm.xlu0 %197, %v176
        %v199 = vpop.permute.xlu0 %198
        %v201 = vperm.slane %v187, 0
        %v202 = vmul.f32 %v199, %v201
        %203 = vset.pattern.permute.xlu0 2
        %204 = vperm.xlu0 %203, %v176
        %v205 = vpop.permute.xlu0 %204
        %v207 = vperm.slane %v188, 0
        %v208 = vmul.f32 %v205, %v207
        %209 = vset.pattern.permute.xlu0 3
        %210 = vperm.xlu0 %209, %v176
        %v211 = vpop.permute.xlu0 %210
        %v213 = vperm.slane %v189, 0
        %v214 = vmul.f32 %v211, %v213
        %v215 = vadd.f32 %v196, %v202
        %v216 = vadd.f32 %v208, %v214
        %v217 = vadd.f32 %v215, %v216
        %218 = vset.pattern.permute.xlu0 96
        %219 = vperm.xlu0 %218, %v176
        %v220 = vpop.permute.xlu0 %219
        %v222 = vmul.f32 %v220, %v182
        %v223 = vadd.f32 %v217, %v222
        %224 = vst [vmem:[#allocation2] sm:$0xff] %v223
        %v225 = vld [vmem:[#allocation2] sm:$0x1]
        %v226 = vld [vmem:[#allocation2 + $0x1] sm:$0x1]
        %v227 = vld [vmem:[#allocation2 + $0x2] sm:$0x1]
        %v228 = vld [vmem:[#allocation2 + $0x3] sm:$0x1]
        %v229 = vld [vmem:[#allocation2 + $0x4] sm:$0x1]
        %v230 = vld [vmem:[#allocation2 + $0x5] sm:$0x1]
        %v231 = vld [vmem:[#allocation2 + $0x6] sm:$0x1]
        %v232 = vld [vmem:[#allocation2 + $0x7] sm:$0x1]
        %233 = vset.pattern.permute.xlu0 8
        %234 = vperm.xlu0 %233, %v176
        %v235 = vpop.permute.xlu0 %234
        %v237 = vperm.slane %v225, 0
        %v238 = vmul.f32 %v235, %v237
        %239 = vset.pattern.permute.xlu0 12
        %240 = vperm.xlu0 %239, %v176
        %v241 = vpop.permute.xlu0 %240
        %v243 = vperm.slane %v229, 0
        %v244 = vmul.f32 %v241, %v243
        %v245 = vadd.f32 %v238, %v244
        %246 = vset.pattern.permute.xlu0 9
        %247 = vperm.xlu0 %246, %v176
        %v248 = vpop.permute.xlu0 %247
        %v250 = vperm.slane %v226, 0
        %v251 = vmul.f32 %v248, %v250
        %252 = vset.pattern.permute.xlu0 13
        %253 = vperm.xlu0 %252, %v176
        %v254 = vpop.permute.xlu0 %253
        %v256 = vperm.slane %v230, 0
        %v257 = vmul.f32 %v254, %v256
        %v258 = vadd.f32 %v251, %v257
        %259 = vset.pattern.permute.xlu0 10
        %260 = vperm.xlu0 %259, %v176
        %v261 = vpop.permute.xlu0 %260
        %v263 = vperm.slane %v227, 0
        %v264 = vmul.f32 %v261, %v263
        %265 = vset.pattern.permute.xlu0 14
        %266 = vperm.xlu0 %265, %v176
        %v267 = vpop.permute.xlu0 %266
        %v269 = vperm.slane %v231, 0
        %v270 = vmul.f32 %v267, %v269
        %v271 = vadd.f32 %v264, %v270
        %272 = vset.pattern.permute.xlu0 11
        %273 = vperm.xlu0 %272, %v176
        %v274 = vpop.permute.xlu0 %273
        %v276 = vperm.slane %v228, 0
        %v277 = vmul.f32 %v274, %v276
        %278 = vset.pattern.permute.xlu0 15
        %279 = vperm.xlu0 %278, %v176
        %v280 = vpop.permute.xlu0 %279
        %v282 = vperm.slane %v232, 0
        %v283 = vmul.f32 %v280, %v282
        %v284 = vadd.f32 %v277, %v283
        %v285 = vadd.f32 %v245, %v258
        %v286 = vadd.f32 %v271, %v284
        %v287 = vadd.f32 %v285, %v286
        %288 = vset.pattern.permute.xlu0 16
        %289 = vperm.xlu0 %288, %v176
        %v290 = vpop.permute.xlu0 %289
        %v292 = vmul.f32 %v290, %v237
        %293 = vset.pattern.permute.xlu0 20
        %294 = vperm.xlu0 %293, %v176
        %v295 = vpop.permute.xlu0 %294
        %v297 = vmul.f32 %v295, %v243
        %v298 = vadd.f32 %v292, %v297
        %299 = vset.pattern.permute.xlu0 17
        %300 = vperm.xlu0 %299, %v176
        %v301 = vpop.permute.xlu0 %300
        %v303 = vmul.f32 %v301, %v250
        %304 = vset.pattern.permute.xlu0 21
        %305 = vperm.xlu0 %304, %v176
        %v306 = vpop.permute.xlu0 %305
        %v308 = vmul.f32 %v306, %v256
        %v309 = vadd.f32 %v303, %v308
        %310 = vset.pattern.permute.xlu0 18
        %311 = vperm.xlu0 %310, %v176
        %v312 = vpop.permute.xlu0 %311
        %v314 = vmul.f32 %v312, %v263
        %315 = vset.pattern.permute.xlu0 22
        %316 = vperm.xlu0 %315, %v176
        %v317 = vpop.permute.xlu0 %316
        %v319 = vmul.f32 %v317, %v269
        %v320 = vadd.f32 %v314, %v319
        %321 = vset.pattern.permute.xlu0 19
        %322 = vperm.xlu0 %321, %v176
        %v323 = vpop.permute.xlu0 %322
        %v325 = vmul.f32 %v323, %v276
        %326 = vset.pattern.permute.xlu0 23
        %327 = vperm.xlu0 %326, %v176
        %v328 = vpop.permute.xlu0 %327
        %v330 = vmul.f32 %v328, %v282
        %v331 = vadd.f32 %v325, %v330
        %v332 = vadd.f32 %v298, %v309
        %v333 = vadd.f32 %v320, %v331
        %v334 = vadd.f32 %v332, %v333
        %335 = vrot.lane.b32.xlu0 %v334, 127
        %v336 = vpop.permute.xlu0 %335
        %v337 = vadd.f32 %v287, %v336
        %338 = vset.pattern.permute.xlu0 97
        %339 = vperm.xlu0 %338, %v176
        %v340 = vpop.permute.xlu0 %339
        %v342 = vadd.f32 %v337, %v340
        %v343 = vmul.f32 %v342, %v185
        %v344 = vtanh.pop %v343
        %v345 = vxor.u32 %v343, 2147483648
        %v346 = vmul.f32 %v345, 1.442695
        %v347 = vpow.pop %v346
        %v348 = vadd.f32 %v347, 1.0
        %v349 = vrcp.pop %v348
        %v350 = vmul.f32 %v348, %v349
        %v351 = vsub.f32 1.0, %v350
        %v352 = vmul.f32 %v349, %v351
        %v353 = vadd.f32 %v349, %v352
        %vm354 = vweird.f32 %v348
        %vm355 = vweird.f32 %v349
        %vm356 = vmor %vm354, %vm355
        %v357 = vsel %vm356, %v349, %v353
        %v358 = vand.u32 2147483647, %v348
        %vm359 = vcmp.eq.f32.partialorder %v358, 8.507059e+37
        %v360 = vand.u32 %v348, 2147483648
        %v361 = vor.u32 1.1754944e-38, %v360
        %v362 = vsel %vm359, %v361, %v357
        %v363 = vmul.f32 1.0, %v362
        %v364 = vmul.f32 %v344, %v363
        %365 = vst [vmem:[#allocation2] sm:$0xff] %v364
        %v366 = vld [vmem:[#allocation2] sm:$0x1]
        %v367 = vld [vmem:[#allocation2 + $0x1] sm:$0x1]
        %v368 = vld [vmem:[#allocation2 + $0x2] sm:$0x1]
        %v369 = vld [vmem:[#allocation2 + $0x3] sm:$0x1]
        %v370 = vld [vmem:[#allocation2 + $0x4] sm:$0x1]
        %v371 = vld [vmem:[#allocation2 + $0x5] sm:$0x1]
        %v372 = vld [vmem:[#allocation2 + $0x6] sm:$0x1]
        %v373 = vld [vmem:[#allocation2 + $0x7] sm:$0x1]
        %374 = vset.pattern.permute.xlu0 56
        %375 = vperm.xlu0 %374, %v176
        %v376 = vpop.permute.xlu0 %375
        %v378 = vperm.slane %v366, 0
        %v379 = vmul.f32 %v376, %v378
        %380 = vset.pattern.permute.xlu0 60
        %381 = vperm.xlu0 %380, %v176
        %v382 = vpop.permute.xlu0 %381
        %v384 = vperm.slane %v370, 0
        %v385 = vmul.f32 %v382, %v384
        %v386 = vadd.f32 %v379, %v385
        %387 = vset.pattern.permute.xlu0 57
        %388 = vperm.xlu0 %387, %v176
        %v389 = vpop.permute.xlu0 %388
        %v391 = vperm.slane %v367, 0
        %v392 = vmul.f32 %v389, %v391
        %393 = vset.pattern.permute.xlu0 61
        %394 = vperm.xlu0 %393, %v176
        %v395 = vpop.permute.xlu0 %394
        %v397 = vperm.slane %v371, 0
        %v398 = vmul.f32 %v395, %v397
        %v399 = vadd.f32 %v392, %v398
        %400 = vset.pattern.permute.xlu0 58
        %401 = vperm.xlu0 %400, %v176
        %v402 = vpop.permute.xlu0 %401
        %v404 = vperm.slane %v368, 0
        %v405 = vmul.f32 %v402, %v404
        %406 = vset.pattern.permute.xlu0 62
        %407 = vperm.xlu0 %406, %v176
        %v408 = vpop.permute.xlu0 %407
        %v410 = vperm.slane %v372, 0
        %v411 = vmul.f32 %v408, %v410
        %v412 = vadd.f32 %v405, %v411
        %413 = vset.pattern.permute.xlu0 59
        %414 = vperm.xlu0 %413, %v176
        %v415 = vpop.permute.xlu0 %414
        %v417 = vperm.slane %v369, 0
        %v418 = vmul.f32 %v415, %v417
        %419 = vset.pattern.permute.xlu0 63
        %420 = vperm.xlu0 %419, %v176
        %v421 = vpop.permute.xlu0 %420
        %v423 = vperm.slane %v373, 0
        %v424 = vmul.f32 %v421, %v423
        %v425 = vadd.f32 %v418, %v424
        %v426 = vadd.f32 %v386, %v399
        %v427 = vadd.f32 %v412, %v425
        %v428 = vadd.f32 %v426, %v427
        %429 = vset.pattern.permute.xlu0 100
        %430 = vperm.xlu0 %429, %v176
        %v431 = vpop.permute.xlu0 %430
        %v433 = vmul.f32 %v431, %v182
        %v434 = vadd.f32 %v428, %v433
        %v435 = vadd.f32 %v434, %v223
        %436 = vst [vmem:[#allocation2] sm:$0xff] %v435
        %v437 = vld [vmem:[#allocation2] sm:$0x1]
        %v438 = vld [vmem:[#allocation2 + $0x1] sm:$0x1]
        %v439 = vld [vmem:[#allocation2 + $0x2] sm:$0x1]
        %v440 = vld [vmem:[#allocation2 + $0x3] sm:$0x1]
        %v441 = vld [vmem:[#allocation2 + $0x4] sm:$0x1]
        %v442 = vld [vmem:[#allocation2 + $0x5] sm:$0x1]
        %v443 = vld [vmem:[#allocation2 + $0x6] sm:$0x1]
        %v444 = vld [vmem:[#allocation2 + $0x7] sm:$0x1]
        %445 = vset.pattern.permute.xlu0 24
        %446 = vperm.xlu0 %445, %v176
        %v447 = vpop.permute.xlu0 %446
        %v449 = vperm.slane %v437, 0
        %v450 = vmul.f32 %v447, %v449
        %451 = vset.pattern.permute.xlu0 28
        %452 = vperm.xlu0 %451, %v176
        %v453 = vpop.permute.xlu0 %452
        %v455 = vperm.slane %v441, 0
        %v456 = vmul.f32 %v453, %v455
        %v457 = vadd.f32 %v450, %v456
        %458 = vset.pattern.permute.xlu0 25
        %459 = vperm.xlu0 %458, %v176
        %v460 = vpop.permute.xlu0 %459
        %v462 = vperm.slane %v438, 0
        %v463 = vmul.f32 %v460, %v462
        %464 = vset.pattern.permute.xlu0 29
        %465 = vperm.xlu0 %464, %v176
        %v466 = vpop.permute.xlu0 %465
        %v468 = vperm.slane %v442, 0
        %v469 = vmul.f32 %v466, %v468
        %v470 = vadd.f32 %v463, %v469
        %471 = vset.pattern.permute.xlu0 26
        %472 = vperm.xlu0 %471, %v176
        %v473 = vpop.permute.xlu0 %472
        %v475 = vperm.slane %v439, 0
        %v476 = vmul.f32 %v473, %v475
        %477 = vset.pattern.permute.xlu0 30
        %478 = vperm.xlu0 %477, %v176
        %v479 = vpop.permute.xlu0 %478
        %v481 = vperm.slane %v443, 0
        %v482 = vmul.f32 %v479, %v481
        %v483 = vadd.f32 %v476, %v482
        %484 = vset.pattern.permute.xlu0 27
        %485 = vperm.xlu0 %484, %v176
        %v486 = vpop.permute.xlu0 %485
        %v488 = vperm.slane %v440, 0
        %v489 = vmul.f32 %v486, %v488
        %490 = vset.pattern.permute.xlu0 31
        %491 = vperm.xlu0 %490, %v176
        %v492 = vpop.permute.xlu0 %491
        %v494 = vperm.slane %v444, 0
        %v495 = vmul.f32 %v492, %v494
        %v496 = vadd.f32 %v489, %v495
        %v497 = vadd.f32 %v457, %v470
        %v498 = vadd.f32 %v483, %v496
        %v499 = vadd.f32 %v497, %v498
        %500 = vrot.lane.b32.xlu0 %v499, 1
        %v501 = vpop.permute.xlu0 %500
        %502 = vset.pattern.permute.xlu0 32
        %503 = vperm.xlu0 %502, %v176
        %v504 = vpop.permute.xlu0 %503
        %v506 = vmul.f32 %v504, %v449
        %507 = vset.pattern.permute.xlu0 36
        %508 = vperm.xlu0 %507, %v176
        %v509 = vpop.permute.xlu0 %508
        %v511 = vmul.f32 %v509, %v455
        %v512 = vadd.f32 %v506, %v511
        %513 = vset.pattern.permute.xlu0 33
        %514 = vperm.xlu0 %513, %v176
        %v515 = vpop.permute.xlu0 %514
        %v517 = vmul.f32 %v515, %v462
        %518 = vset.pattern.permute.xlu0 37
        %519 = vperm.xlu0 %518, %v176
        %v520 = vpop.permute.xlu0 %519
        %v522 = vmul.f32 %v520, %v468
        %v523 = vadd.f32 %v517, %v522
        %524 = vset.pattern.permute.xlu0 34
        %525 = vperm.xlu0 %524, %v176
        %v526 = vpop.permute.xlu0 %525
        %v528 = vmul.f32 %v526, %v475
        %529 = vset.pattern.permute.xlu0 38
        %530 = vperm.xlu0 %529, %v176
        %v531 = vpop.permute.xlu0 %530
        %v533 = vmul.f32 %v531, %v481
        %v534 = vadd.f32 %v528, %v533
        %535 = vset.pattern.permute.xlu0 35
        %536 = vperm.xlu0 %535, %v176
        %v537 = vpop.permute.xlu0 %536
        %v539 = vmul.f32 %v537, %v488
        %540 = vset.pattern.permute.xlu0 39
        %541 = vperm.xlu0 %540, %v176
        %v542 = vpop.permute.xlu0 %541
        %v544 = vmul.f32 %v542, %v494
        %v545 = vadd.f32 %v539, %v544
        %v546 = vadd.f32 %v512, %v523
        %v547 = vadd.f32 %v534, %v545
        %v548 = vadd.f32 %v546, %v547
        %549 = vrot.lane.b32.xlu0 %v548, 127
        %v550 = vpop.permute.xlu0 %549
        %v551 = vadd.f32 %v501, %v550
        %552 = vset.pattern.permute.xlu0 98
        %553 = vperm.xlu0 %552, %v176
        %v554 = vpop.permute.xlu0 %553
        %v556 = vadd.f32 %v551, %v554
        %v557 = vmul.f32 %v556, %v182
        %v558 = vtanh.pop %v557
        %v559 = vxor.u32 %v557, 2147483648
        %v560 = vmul.f32 %v559, 1.442695
        %v561 = vpow.pop %v560
        %v562 = vadd.f32 %v561, 1.0
        %v563 = vrcp.pop %v562
        %v564 = vmul.f32 %v562, %v563
        %v565 = vsub.f32 1.0, %v564
        %v566 = vmul.f32 %v563, %v565
        %v567 = vadd.f32 %v563, %v566
        %vm568 = vweird.f32 %v562
        %vm569 = vweird.f32 %v563
        %vm570 = vmor %vm568, %vm569
        %v571 = vsel %vm570, %v563, %v567
        %v572 = vand.u32 2147483647, %v562
        %vm573 = vcmp.eq.f32.partialorder %v572, 8.507059e+37
        %v574 = vand.u32 %v562, 2147483648
        %v575 = vor.u32 1.1754944e-38, %v574
        %v576 = vsel %vm573, %v575, %v571
        %v577 = vmul.f32 1.0, %v576
        %v578 = vmul.f32 %v558, %v577
        %579 = vst [vmem:[#allocation2] sm:$0xff] %v578
        %v580 = vld [vmem:[#allocation2] sm:$0x1]
        %v581 = vld [vmem:[#allocation2 + $0x1] sm:$0x1]
        %v582 = vld [vmem:[#allocation2 + $0x2] sm:$0x1]
        %v583 = vld [vmem:[#allocation2 + $0x3] sm:$0x1]
        %v584 = vld [vmem:[#allocation2 + $0x4] sm:$0x1]
        %v585 = vld [vmem:[#allocation2 + $0x5] sm:$0x1]
        %v586 = vld [vmem:[#allocation2 + $0x6] sm:$0x1]
        %v587 = vld [vmem:[#allocation2 + $0x7] sm:$0x1]
        %588 = vset.pattern.permute.xlu0 64
        %589 = vperm.xlu0 %588, %v176
        %v590 = vpop.permute.xlu0 %589
        %v592 = vperm.slane %v580, 0
        %v593 = vmul.f32 %v590, %v592
        %594 = vset.pattern.permute.xlu0 68
        %595 = vperm.xlu0 %594, %v176
        %v596 = vpop.permute.xlu0 %595
        %v598 = vperm.slane %v584, 0
        %v599 = vmul.f32 %v596, %v598
        %v600 = vadd.f32 %v593, %v599
        %601 = vset.pattern.permute.xlu0 65
        %602 = vperm.xlu0 %601, %v176
        %v603 = vpop.permute.xlu0 %602
        %v605 = vperm.slane %v581, 0
        %v606 = vmul.f32 %v603, %v605
        %607 = vset.pattern.permute.xlu0 69
        %608 = vperm.xlu0 %607, %v176
        %v609 = vpop.permute.xlu0 %608
        %v611 = vperm.slane %v585, 0
        %v612 = vmul.f32 %v609, %v611
        %v613 = vadd.f32 %v606, %v612
        %614 = vset.pattern.permute.xlu0 66
        %615 = vperm.xlu0 %614, %v176
        %v616 = vpop.permute.xlu0 %615
        %v618 = vperm.slane %v582, 0
        %v619 = vmul.f32 %v616, %v618
        %620 = vset.pattern.permute.xlu0 70
        %621 = vperm.xlu0 %620, %v176
        %v622 = vpop.permute.xlu0 %621
        %v624 = vperm.slane %v586, 0
        %v625 = vmul.f32 %v622, %v624
        %v626 = vadd.f32 %v619, %v625
        %627 = vset.pattern.permute.xlu0 67
        %628 = vperm.xlu0 %627, %v176
        %v629 = vpop.permute.xlu0 %628
        %v631 = vperm.slane %v583, 0
        %v632 = vmul.f32 %v629, %v631
        %633 = vset.pattern.permute.xlu0 71
        %634 = vperm.xlu0 %633, %v176
        %v635 = vpop.permute.xlu0 %634
        %v637 = vperm.slane %v587, 0
        %v638 = vmul.f32 %v635, %v637
        %v639 = vadd.f32 %v632, %v638
        %v640 = vadd.f32 %v600, %v613
        %v641 = vadd.f32 %v626, %v639
        %v642 = vadd.f32 %v640, %v641
        %643 = vset.pattern.permute.xlu0 101
        %644 = vperm.xlu0 %643, %v176
        %v645 = vpop.permute.xlu0 %644
        %v647 = vmul.f32 %v645, %v182
        %v648 = vadd.f32 %v642, %v647
        %v649 = vadd.f32 %v648, %v435
        %650 = vst [vmem:[#allocation2] sm:$0xff] %v649
        %v651 = vld [vmem:[#allocation2] sm:$0x1]
        %v652 = vld [vmem:[#allocation2 + $0x1] sm:$0x1]
        %v653 = vld [vmem:[#allocation2 + $0x2] sm:$0x1]
        %v654 = vld [vmem:[#allocation2 + $0x3] sm:$0x1]
        %v655 = vld [vmem:[#allocation2 + $0x4] sm:$0x1]
        %v656 = vld [vmem:[#allocation2 + $0x5] sm:$0x1]
        %v657 = vld [vmem:[#allocation2 + $0x6] sm:$0x1]
        %v658 = vld [vmem:[#allocation2 + $0x7] sm:$0x1]
        %659 = vset.pattern.permute.xlu0 40
        %660 = vperm.xlu0 %659, %v176
        %v661 = vpop.permute.xlu0 %660
        %v663 = vperm.slane %v651, 0
        %v664 = vmul.f32 %v661, %v663
        %665 = vset.pattern.permute.xlu0 44
        %666 = vperm.xlu0 %665, %v176
        %v667 = vpop.permute.xlu0 %666
        %v669 = vperm.slane %v655, 0
        %v670 = vmul.f32 %v667, %v669
        %v671 = vadd.f32 %v664, %v670
        %672 = vset.pattern.permute.xlu0 41
        %673 = vperm.xlu0 %672, %v176
        %v674 = vpop.permute.xlu0 %673
        %v676 = vperm.slane %v652, 0
        %v677 = vmul.f32 %v674, %v676
        %678 = vset.pattern.permute.xlu0 45
        %679 = vperm.xlu0 %678, %v176
        %v680 = vpop.permute.xlu0 %679
        %v682 = vperm.slane %v656, 0
        %v683 = vmul.f32 %v680, %v682
        %v684 = vadd.f32 %v677, %v683
        %685 = vset.pattern.permute.xlu0 42
        %686 = vperm.xlu0 %685, %v176
        %v687 = vpop.permute.xlu0 %686
        %v689 = vperm.slane %v653, 0
        %v690 = vmul.f32 %v687, %v689
        %691 = vset.pattern.permute.xlu0 46
        %692 = vperm.xlu0 %691, %v176
        %v693 = vpop.permute.xlu0 %692
        %v695 = vperm.slane %v657, 0
        %v696 = vmul.f32 %v693, %v695
        %v697 = vadd.f32 %v690, %v696
        %698 = vset.pattern.permute.xlu0 43
        %699 = vperm.xlu0 %698, %v176
        %v700 = vpop.permute.xlu0 %699
        %v702 = vperm.slane %v654, 0
        %v703 = vmul.f32 %v700, %v702
        %704 = vset.pattern.permute.xlu0 47
        %705 = vperm.xlu0 %704, %v176
        %v706 = vpop.permute.xlu0 %705
        %v708 = vperm.slane %v658, 0
        %v709 = vmul.f32 %v706, %v708
        %v710 = vadd.f32 %v703, %v709
        %v711 = vadd.f32 %v671, %v684
        %v712 = vadd.f32 %v697, %v710
        %v713 = vadd.f32 %v711, %v712
        %714 = vrot.lane.b32.xlu0 %v713, 2
        %v715 = vpop.permute.xlu0 %714
        %716 = vset.pattern.permute.xlu0 48
        %717 = vperm.xlu0 %716, %v176
        %v718 = vpop.permute.xlu0 %717
        %v720 = vmul.f32 %v718, %v663
        %721 = vset.pattern.permute.xlu0 52
        %722 = vperm.xlu0 %721, %v176
        %v723 = vpop.permute.xlu0 %722
        %v725 = vmul.f32 %v723, %v669
        %v726 = vadd.f32 %v720, %v725
        %727 = vset.pattern.permute.xlu0 49
        %728 = vperm.xlu0 %727, %v176
        %v729 = vpop.permute.xlu0 %728
        %v731 = vmul.f32 %v729, %v676
        %732 = vset.pattern.permute.xlu0 53
        %733 = vperm.xlu0 %732, %v176
        %v734 = vpop.permute.xlu0 %733
        %v736 = vmul.f32 %v734, %v682
        %v737 = vadd.f32 %v731, %v736
        %738 = vset.pattern.permute.xlu0 50
        %739 = vperm.xlu0 %738, %v176
        %v740 = vpop.permute.xlu0 %739
        %v742 = vmul.f32 %v740, %v689
        %743 = vset.pattern.permute.xlu0 54
        %744 = vperm.xlu0 %743, %v176
        %v745 = vpop.permute.xlu0 %744
        %v747 = vmul.f32 %v745, %v695
        %v748 = vadd.f32 %v742, %v747
        %749 = vset.pattern.permute.xlu0 51
        %750 = vperm.xlu0 %749, %v176
        %v751 = vpop.permute.xlu0 %750
        %v753 = vmul.f32 %v751, %v702
        %754 = vset.pattern.permute.xlu0 55
        %755 = vperm.xlu0 %754, %v176
        %v756 = vpop.permute.xlu0 %755
        %v758 = vmul.f32 %v756, %v708
        %v759 = vadd.f32 %v753, %v758
        %v760 = vadd.f32 %v726, %v737
        %v761 = vadd.f32 %v748, %v759
        %v762 = vadd.f32 %v760, %v761
        %763 = vrot.lane.b32.xlu0 %v762, 126
        %v764 = vpop.permute.xlu0 %763
        %v765 = vadd.f32 %v715, %v764
        %766 = vset.pattern.permute.xlu0 99
        %767 = vperm.xlu0 %766, %v176
        %v768 = vpop.permute.xlu0 %767
        %v770 = vadd.f32 %v765, %v768
        %v771 = vmul.f32 %v770, %v182
        %v772 = vtanh.pop %v771
        %v773 = vxor.u32 %v771, 2147483648
        %v774 = vmul.f32 %v773, 1.442695
        %v775 = vpow.pop %v774
        %v776 = vadd.f32 %v775, 1.0
        %v777 = vrcp.pop %v776
        %v778 = vmul.f32 %v776, %v777
        %v779 = vsub.f32 1.0, %v778
        %v780 = vmul.f32 %v777, %v779
        %v781 = vadd.f32 %v777, %v780
        %vm782 = vweird.f32 %v776
        %vm783 = vweird.f32 %v777
        %vm784 = vmor %vm782, %vm783
        %v785 = vsel %vm784, %v777, %v781
        %v786 = vand.u32 2147483647, %v776
        %vm787 = vcmp.eq.f32.partialorder %v786, 8.507059e+37
        %v788 = vand.u32 %v776, 2147483648
        %v789 = vor.u32 1.1754944e-38, %v788
        %v790 = vsel %vm787, %v789, %v785
        %v791 = vmul.f32 1.0, %v790
        %v792 = vmul.f32 %v772, %v791
        %793 = vst [vmem:[#allocation2] sm:$0xff] %v792
        %v794 = vld [vmem:[#allocation2] sm:$0x1]
        %v795 = vld [vmem:[#allocation2 + $0x1] sm:$0x1]
        %v796 = vld [vmem:[#allocation2 + $0x2] sm:$0x1]
        %v797 = vld [vmem:[#allocation2 + $0x3] sm:$0x1]
        %v798 = vld [vmem:[#allocation2 + $0x4] sm:$0x1]
        %v799 = vld [vmem:[#allocation2 + $0x5] sm:$0x1]
        %v800 = vld [vmem:[#allocation2 + $0x6] sm:$0x1]
        %v801 = vld [vmem:[#allocation2 + $0x7] sm:$0x1]
        %802 = vset.pattern.permute.xlu0 72
        %803 = vperm.xlu0 %802, %v176
        %v804 = vpop.permute.xlu0 %803
        %v806 = vperm.slane %v794, 0
        %v807 = vmul.f32 %v804, %v806
        %808 = vset.pattern.permute.xlu0 76
        %809 = vperm.xlu0 %808, %v176
        %v810 = vpop.permute.xlu0 %809
        %v812 = vperm.slane %v798, 0
        %v813 = vmul.f32 %v810, %v812
        %v814 = vadd.f32 %v807, %v813
        %815 = vset.pattern.permute.xlu0 73
        %816 = vperm.xlu0 %815, %v176
        %v817 = vpop.permute.xlu0 %816
        %v819 = vperm.slane %v795, 0
        %v820 = vmul.f32 %v817, %v819
        %821 = vset.pattern.permute.xlu0 77
        %822 = vperm.xlu0 %821, %v176
        %v823 = vpop.permute.xlu0 %822
        %v825 = vperm.slane %v799, 0
        %v826 = vmul.f32 %v823, %v825
        %v827 = vadd.f32 %v820, %v826
        %828 = vset.pattern.permute.xlu0 74
        %829 = vperm.xlu0 %828, %v176
        %v830 = vpop.permute.xlu0 %829
        %v832 = vperm.slane %v796, 0
        %v833 = vmul.f32 %v830, %v832
        %834 = vset.pattern.permute.xlu0 78
        %835 = vperm.xlu0 %834, %v176
        %v836 = vpop.permute.xlu0 %835
        %v838 = vperm.slane %v800, 0
        %v839 = vmul.f32 %v836, %v838
        %v840 = vadd.f32 %v833, %v839
        %841 = vset.pattern.permute.xlu0 75
        %842 = vperm.xlu0 %841, %v176
        %v843 = vpop.permute.xlu0 %842
        %v845 = vperm.slane %v797, 0
        %v846 = vmul.f32 %v843, %v845
        %847 = vset.pattern.permute.xlu0 79
        %848 = vperm.xlu0 %847, %v176
        %v849 = vpop.permute.xlu0 %848
        %v851 = vperm.slane %v801, 0
        %v852 = vmul.f32 %v849, %v851
        %v853 = vadd.f32 %v846, %v852
        %v854 = vadd.f32 %v814, %v827
        %v855 = vadd.f32 %v840, %v853
        %v856 = vadd.f32 %v854, %v855
        %857 = vset.pattern.permute.xlu0 102
        %858 = vperm.xlu0 %857, %v176
        %v859 = vpop.permute.xlu0 %858
        %v861 = vmul.f32 %v859, %v182
        %v862 = vadd.f32 %v856, %v861
        %v863 = vadd.f32 %v862, %v649
        %v864 = vmax.f32 %v863, 0.0
        %865 = vst [vmem:[#allocation2] sm:$0xff] %v864
        %v866 = vld [vmem:[#allocation2] sm:$0x1]
        %v867 = vld [vmem:[#allocation2 + $0x1] sm:$0x1]
        %v868 = vld [vmem:[#allocation2 + $0x2] sm:$0x1]
        %v869 = vld [vmem:[#allocation2 + $0x3] sm:$0x1]
        %v870 = vld [vmem:[#allocation2 + $0x4] sm:$0x1]
        %v871 = vld [vmem:[#allocation2 + $0x5] sm:$0x1]
        %v872 = vld [vmem:[#allocation2 + $0x6] sm:$0x1]
        %v873 = vld [vmem:[#allocation2 + $0x7] sm:$0x1]
        %874 = vset.pattern.permute.xlu0 80
        %875 = vperm.xlu0 %874, %v176
        %v876 = vpop.permute.xlu0 %875
        %v878 = vperm.slane %v866, 0
        %v879 = vmul.f32 %v876, %v878
        %880 = vset.pattern.permute.xlu0 84
        %881 = vperm.xlu0 %880, %v176
        %v882 = vpop.permute.xlu0 %881
        %v884 = vperm.slane %v870, 0
        %v885 = vmul.f32 %v882, %v884
        %v886 = vadd.f32 %v879, %v885
        %887 = vset.pattern.permute.xlu0 81
        %888 = vperm.xlu0 %887, %v176
        %v889 = vpop.permute.xlu0 %888
        %v891 = vperm.slane %v867, 0
        %v892 = vmul.f32 %v889, %v891
        %893 = vset.pattern.permute.xlu0 85
        %894 = vperm.xlu0 %893, %v176
        %v895 = vpop.permute.xlu0 %894
        %v897 = vperm.slane %v871, 0
        %v898 = vmul.f32 %v895, %v897
        %v899 = vadd.f32 %v892, %v898
        %900 = vset.pattern.permute.xlu0 82
        %901 = vperm.xlu0 %900, %v176
        %v902 = vpop.permute.xlu0 %901
        %v904 = vperm.slane %v868, 0
        %v905 = vmul.f32 %v902, %v904
        %906 = vset.pattern.permute.xlu0 86
        %907 = vperm.xlu0 %906, %v176
        %v908 = vpop.permute.xlu0 %907
        %v910 = vperm.slane %v872, 0
        %v911 = vmul.f32 %v908, %v910
        %v912 = vadd.f32 %v905, %v911
        %913 = vset.pattern.permute.xlu0 83
        %914 = vperm.xlu0 %913, %v176
        %v915 = vpop.permute.xlu0 %914
        %v917 = vperm.slane %v869, 0
        %v918 = vmul.f32 %v915, %v917
        %919 = vset.pattern.permute.xlu0 87
        %920 = vperm.xlu0 %919, %v176
        %v921 = vpop.permute.xlu0 %920
        %v923 = vperm.slane %v873, 0
        %v924 = vmul.f32 %v921, %v923
        %v925 = vadd.f32 %v918, %v924
        %v926 = vadd.f32 %v886, %v899
        %v927 = vadd.f32 %v912, %v925
        %v928 = vadd.f32 %v926, %v927
        %929 = vset.pattern.permute.xlu0 103
        %930 = vperm.xlu0 %929, %v176
        %v931 = vpop.permute.xlu0 %930
        %v933 = vadd.f32 %v928, %v931
        %v934 = vmax.f32 %v933, 0.0
        %935 = vst [vmem:[#allocation2] sm:$0xff] %v934
        %v936 = vld [vmem:[#allocation2] sm:$0x1]
        %v937 = vld [vmem:[#allocation2 + $0x1] sm:$0x1]
        %v938 = vld [vmem:[#allocation2 + $0x2] sm:$0x1]
        %v939 = vld [vmem:[#allocation2 + $0x3] sm:$0x1]
        %v940 = vld [vmem:[#allocation2 + $0x4] sm:$0x1]
        %v941 = vld [vmem:[#allocation2 + $0x5] sm:$0x1]
        %v942 = vld [vmem:[#allocation2 + $0x6] sm:$0x1]
        %v943 = vld [vmem:[#allocation2 + $0x7] sm:$0x1]
        %944 = vset.pattern.permute.xlu0 88
        %945 = vperm.xlu0 %944, %v176
        %v946 = vpop.permute.xlu0 %945
        %v948 = vperm.slane %v936, 0
        %v949 = vmul.f32 %v946, %v948
        %950 = vset.pattern.permute.xlu0 92
        %951 = vperm.xlu0 %950, %v176
        %v952 = vpop.permute.xlu0 %951
        %v954 = vperm.slane %v940, 0
        %v955 = vmul.f32 %v952, %v954
        %v956 = vadd.f32 %v949, %v955
        %957 = vset.pattern.permute.xlu0 89
        %958 = vperm.xlu0 %957, %v176
        %v959 = vpop.permute.xlu0 %958
        %v961 = vperm.slane %v937, 0
        %v962 = vmul.f32 %v959, %v961
        %963 = vset.pattern.permute.xlu0 93
        %964 = vperm.xlu0 %963, %v176
        %v965 = vpop.permute.xlu0 %964
        %v967 = vperm.slane %v941, 0
        %v968 = vmul.f32 %v965, %v967
        %v969 = vadd.f32 %v962, %v968
        %970 = vset.pattern.permute.xlu0 90
        %971 = vperm.xlu0 %970, %v176
        %v972 = vpop.permute.xlu0 %971
        %v974 = vperm.slane %v938, 0
        %v975 = vmul.f32 %v972, %v974
        %976 = vset.pattern.permute.xlu0 94
        %977 = vperm.xlu0 %976, %v176
        %v978 = vpop.permute.xlu0 %977
        %v980 = vperm.slane %v942, 0
        %v981 = vmul.f32 %v978, %v980
        %v982 = vadd.f32 %v975, %v981
        %983 = vset.pattern.permute.xlu0 91
        %984 = vperm.xlu0 %983, %v176
        %v985 = vpop.permute.xlu0 %984
        %v987 = vperm.slane %v939, 0
        %v988 = vmul.f32 %v985, %v987
        %989 = vset.pattern.permute.xlu0 95
        %990 = vperm.xlu0 %989, %v176
        %v991 = vpop.permute.xlu0 %990
        %v993 = vperm.slane %v943, 0
        %v994 = vmul.f32 %v991, %v993
        %v995 = vadd.f32 %v988, %v994
        %v996 = vadd.f32 %v956, %v969
        %v997 = vadd.f32 %v982, %v995
        %v998 = vadd.f32 %v996, %v997
        %999 = vset.pattern.permute.xlu0 104
        %1000 = vperm.xlu0 %999, %v176
        %v1001 = vpop.permute.xlu0 %1000
        %v1003 = vadd.f32 %v998, %v1001
        %v1004 = vtanh.pop %v1003
        %1005 = vst [vmem:[%s175] sm:$0xff] %v1004
        %s1006 = sand.u32 %s75, 1
        %s1007 = scalar_lea.sflag [#allocation5], %s1006
        %s1008 = sand.u32 %s75, 1
        %s1009 = smul.addr %s1008, 8
        %s1010 = scalar_lea.vmem [#allocation8], %s1009
        // Predicated region
        $region37: #{tpu_custom_call.1} parent=27 // pred_check
          %p1011 = pneg %p85
        $region38: #{tpu_custom_call.1} parent=27 // pred_check_branch
          %1013 = sbr.rel (%p1011) target = $region40
        $region39: #{tpu_custom_call.1} parent=27 // pred_region
          %1015 = vsyncadd %s1007, 0
          %s1016 = smul.addr %s20, 8
          %s1017 = scalar_lea.hbm %s2, %s1016
          %s1019 = sshll.u32 %s1010, 4
          %s1020 = int_to_ptr.vmem [resolvable:$true] %s1019
          %s1021 = sshll.u32 %s1017, 4
          %s1022 = int_to_ptr.hbm [resolvable:$true] %s1021
          %1024 = dma.vmem_to_hbm [thread:$0]  %s1020, 128, %s1022, %s1007
        $region40: #{tpu_custom_call.1} parent=27 // pred_fallthru
          _
      $region28: #{tpu_custom_call.1} parent=5 // pred_fallthru
        _
      %p1025 = scmp.le.s32.totalorder 2, %s15
      // Predicated region
      $region41: #{tpu_custom_call.1} parent=5 // pred_check
        %p1026 = pneg %p1025
      $region42: #{tpu_custom_call.1} parent=5 // pred_check_branch
        %1028 = sbr.rel (%p1026) target = $region44
      $region43: #{tpu_custom_call.1} parent=5 // pred_region
        %s1029 = ssub.s32 %s15, 2
        // Predicated region
        $region45: #{tpu_custom_call.1} parent=43 // pred_check
          %p1030 = pneg %p91
        $region46: #{tpu_custom_call.1} parent=43 // pred_check_branch
          %1032 = sbr.rel (%p1030) target = $region48
        $region47: #{tpu_custom_call.1} parent=43 // pred_region
          %s1033 = sand.u32 %s76, 1
          %s1034 = scalar_lea.sflag [#allocation5], %s1033
          %s1035 = sand.u32 %s76, 1
          %s1036 = smul.addr %s1035, 8
          %s1037 = scalar_lea.vmem [#allocation8], %s1036
          %1039 = dma.done %s1034, 128
        $region48: #{tpu_custom_call.1} parent=43 // pred_fallthru
          _
      $region44: #{tpu_custom_call.1} parent=5 // pred_fallthru
        _
    $region6: #{tpu_custom_call.1} parent=1 // loop_footer
      %s19 = sadd.s32 1, %s15
    $region7: #{tpu_custom_call.1} parent=1 // loop_footer_branch
      %14 = sbr.rel target = $region3
    $region8: #{tpu_custom_call.1} parent=1 // loop_exit
      _
    %1040 = vsyncpa [#allocation4], 1
    %s1041 = scalar_lea.sflag [#allocation4], 1
    %1042 = vsyncpa %s1041, 1
    %1043 = vsyncpa [#allocation7], 1
    %1044 = vsyncpa [#allocation5], 1
    %s1045 = scalar_lea.sflag [#allocation5], 1
    %1046 = vsyncpa %s1045, 1

</llo_original>
